<compile_context>
chip_gen: v7x
topology: tpu7x:2x2x1
jax: 0.10.0
libtpu: 0.0.40
codegen_flags: <defaults>
</compile_context>

<pallas_src>
import jax
import jax.numpy as jnp
from jax.experimental import pallas as pl
from jax.experimental.pallas import tpu as pltpu

_N_CHROM = 24


def _chrom_embed_kernel(chr_ref, ce_ref, out_ref):
    # chr_ref : VMEM int32 [Bt, 1]      chromosome ids (1..24) for this batch tile
    # ce_ref  : VMEM f32   [24, L*C]    pre-tiled embedding table (resident block)
    # out_ref : VMEM f32   [Bt, L*C]    lane-dense output slab
    bt = out_ref.shape[0]

    # 1-indexed -> 0-indexed; clamp so padded / untrusted ids (and the undefined
    # tail of a partial last ids block) can never produce an out-of-range select.
    row = jnp.clip(chr_ref[...] - 1, 0, _N_CHROM - 1)                     # (Bt, 1)

    # Row gather as a one-hot matmul on the (otherwise idle) MXU.  Because the
    # table was pre-tiled to (24, L*C) in the wrapper, the matmul result IS the
    # broadcast-over-L output: it is stored once, with no extra tile/copy pass.
    onehot = (jax.lax.broadcasted_iota(jnp.int32, (bt, _N_CHROM), 1) == row)
    out_ref[...] = jnp.dot(
        onehot.astype(jnp.float32),
        ce_ref[...],
        preferred_element_type=jnp.float32,
        precision=jax.lax.Precision.HIGHEST,  # exact f32 selection (bf16 multi-pass)
    )


def _round_up(x, m):
    return ((x + m - 1) // m) * m


def _pick_batch_tile(bs, lane_cols, vmem_budget_bytes=16 << 20):
    """Largest batch tile (multiple of 8, <= 2048) whose pipeline working set fits
    the VMEM budget, capped so the grid keeps >= 2 steps for v7x's 2 TensorCores."""
    lc_pad = _round_up(lane_cols, 128)          # lane padding of the f32 output row
    out_row = lc_pad * 4                        # bytes / batch element (output block)
    ids_row = 128 * 4                           # (Bt, 1) int32 block lane-pads 1 -> 128
    ce_resident = 2 * _N_CHROM * lc_pad * 4     # tiled table (double-buffer bound)
    per_row = 2 * (out_row + ids_row)           # double-buffered input + output
    avail = max(vmem_budget_bytes - ce_resident, 8 * per_row)
    tile = (avail // per_row) // 8 * 8
    tile = max(8, min(tile, 2048))

    bs8 = _round_up(bs, 8)
    tile = min(tile, bs8)                       # never larger than the (padded) batch
    if bs8 >= 16:
        # keep >= 2 grid steps so both v7x TensorCores get work
        tile = min(tile, _round_up(pl.cdiv(bs, 2), 8))
    return tile


def chromosome_embedding(tensor, chr_idx, ce, bin_size, *, batch_tile=None):
    """Pallas implementation of ChromosomeEmbedding.forward.

    tensor : any array whose leading dim is the batch size (only bs is used,
             exactly like the PyTorch forward)
    chr_idx: int [bs], chromosome ids in 1..24
    ce     : float32 [24, channels], the learned embedding table
    returns: float32 [bs, bin_size + 1, channels]
    """
    bs = tensor.shape[0]
    channels = ce.shape[1]
    L = bin_size + 1
    lc = L * channels

    # Fold the L-axis broadcast into the table once (plain XLA, tiny).
    # TODO(synk): if the consumer can broadcast over L itself, skip this tile and
    # emit only the (bs, channels) rows to cut HBM write traffic by (bin_size+1)x.
    ce_tiled = jnp.tile(ce.astype(jnp.float32), (1, L))                   # (24, L*C)

    b_tile = batch_tile if batch_tile is not None else _pick_batch_tile(bs, lc)
    grid = (pl.cdiv(bs, b_tile),)

    chr2d = chr_idx.astype(jnp.int32).reshape(bs, 1)

    out2d = pl.pallas_call(
        _chrom_embed_kernel,
        out_shape=jax.ShapeDtypeStruct((bs, lc), jnp.float32),
        grid=grid,
        in_specs=[
            # chromosome ids for this batch tile
            pl.BlockSpec((b_tile, 1), lambda i: (i, 0)),
            # pre-tiled table: constant block index -> loaded once, kept resident
            pl.BlockSpec((_N_CHROM, lc), lambda i: (0, 0)),
        ],
        # lane-dense output block: full L*C row along lanes
        out_specs=pl.BlockSpec((b_tile, lc), lambda i: (i, 0)),
        compiler_params=pltpu.CompilerParams(
            dimension_semantics=("parallel",),   # independent batch tiles (2 TCs on v7x)
            vmem_limit_bytes=32 << 20,           # explicit: above v5e's 16 MiB default
        ),
        cost_estimate=pl.CostEstimate(
            flops=2 * bs * _N_CHROM * lc,
            transcendentals=0,
            bytes_accessed=bs * lc * 4 + bs * 4 + _N_CHROM * lc * 4,
        ),
    )(chr2d, ce_tiled)

    # Row-major reshape back to the module's (bs, bin_size + 1, channels) layout.
    return out2d.reshape(bs, L, channels)


if __name__ == "__main__":
    key = jax.random.PRNGKey(0)
    k_ce, k_x, k_chr = jax.random.split(key, 3)

    channels = 32
    bin_size = 16          # -> L = 17
    bs = 2

    # deterministic "parameters" (nn.Parameter(torch.randn(24, channels)))
    ce = jax.random.normal(k_ce, (24, channels), dtype=jnp.float32)

    # forward inputs
    x = jax.random.normal(k_x, (bs, bin_size + 1, channels), dtype=jnp.float32)
    chr_idx = jax.random.randint(k_chr, (bs,), 1, 25, dtype=jnp.int32)  # 1..24

    out = jax.block_until_ready(chromosome_embedding(x, chr_idx, ce, bin_size))

    # pure-JAX reference
    ref = jnp.broadcast_to(
        jnp.take(ce, chr_idx - 1, axis=0)[:, None, :],
        (bs, bin_size + 1, channels),
    )
    assert out.shape == (bs, bin_size + 1, channels)
    assert jnp.allclose(out, ref), "mismatch vs reference"

    # Also exercise the multi-step grid (auto-picked tile -> 2 steps) and a
    # partial last batch tile with an explicit tile override.
    bs2 = 20
    k_x2, k_chr2 = jax.random.split(k_x)
    x2 = jax.random.normal(k_x2, (bs2, bin_size + 1, channels), dtype=jnp.float32)
    chr2 = jax.random.randint(k_chr2, (bs2,), 1, 25, dtype=jnp.int32)
    out2a = jax.block_until_ready(chromosome_embedding(x2, chr2, ce, bin_size))
    out2b = jax.block_until_ready(
        chromosome_embedding(x2, chr2, ce, bin_size, batch_tile=8)
    )
    ref2 = jnp.broadcast_to(
        jnp.take(ce, chr2 - 1, axis=0)[:, None, :],
        (bs2, bin_size + 1, channels),
    )
    assert jnp.allclose(out2a, ref2), "mismatch vs reference (auto-tiled path)"
    assert jnp.allclose(out2b, ref2), "mismatch vs reference (partial-tile path)"

    print("KERNEL_OK")
</pallas_src>

<mosaic_0001>
module attributes {stable_mosaic.version = 11 : i64} {
  func.func @_chrom_embed_kernel(%arg0: i32, %arg1: memref<8x1xi32, #tpu.memory_space<vmem>>, %arg2: memref<24x544xf32, #tpu.memory_space<vmem>>, %arg3: memref<8x544xf32, #tpu.memory_space<vmem>>) attributes {dimension_semantics = [#tpu.dimension_semantics<parallel>], iteration_bounds = array<i64: 1>, scalar_prefetch = 0 : i64, scratch_operands = 0 : i64, tpu.core_type = #tpu.core_type<tc>, window_params = [{transform_indices = @transform_0, window_bounds = array<i64: 8, 1>}, {pipeline_mode = #tpu.pipeline_mode<synchronous>, transform_indices = @transform_1, window_bounds = array<i64: 24, 544>}, {transform_indices = @transform_2, window_bounds = array<i64: 8, 544>}]} {
    %c0 = arith.constant 0 : index
    %c0_0 = arith.constant 0 : index
    %0 = vector.load %arg1[%c0, %c0_0] : memref<8x1xi32, #tpu.memory_space<vmem>>, vector<8x1xi32>
    %c1_i32 = arith.constant 1 : i32
    %1 = vector.broadcast %c1_i32 : i32 to vector<8x1xi32>
    %2 = arith.subi %0, %1 : vector<8x1xi32>
    %c0_i32 = arith.constant 0 : i32
    %c23_i32 = arith.constant 23 : i32
    %3 = vector.broadcast %c0_i32 : i32 to vector<8x1xi32>
    %4 = arith.maxsi %3, %2 : vector<8x1xi32>
    %5 = vector.broadcast %c23_i32 : i32 to vector<8x1xi32>
    %6 = arith.minsi %5, %4 : vector<8x1xi32>
    %7 = tpu.iota {dimensions = array<i32: 1>} : vector<8x24xi32>
    %8 = vector.broadcast %6 : vector<8x1xi32> to vector<8x24xi32>
    %9 = arith.cmpi eq, %7, %8 : vector<8x24xi32>
    %10 = arith.extui %9 : vector<8x24xi1> to vector<8x24xi32>
    %11 = arith.sitofp %10 : vector<8x24xi32> to vector<8x24xf32>
    %c0_1 = arith.constant 0 : index
    %c0_2 = arith.constant 0 : index
    %12 = vector.load %arg2[%c0_1, %c0_2] : memref<24x544xf32, #tpu.memory_space<vmem>>, vector<24x544xf32>
    %cst = arith.constant dense<0.000000e+00> : vector<8x544xf32>
    %13 = tpu.matmul %11, %12, %cst {dimension_numbers = #tpu.dot_dimension_numbers<[1], [0], [0], [1], [0, 0, 1, 1], [], []>, precision = #tpu.contract_precision<fp32>} : vector<8x24xf32>, vector<24x544xf32>, vector<8x544xf32> -> vector<8x544xf32>
    %c0_3 = arith.constant 0 : index
    %c0_4 = arith.constant 0 : index
    %14 = vector.load %arg3[%c0_3, %c0_4] : memref<8x544xf32, #tpu.memory_space<vmem>>, vector<8x544xf32>
    tpu.vector_store %arg3[%c0_3, %c0_4], %13 {strides = array<i32>} : memref<8x544xf32, #tpu.memory_space<vmem>>, vector<8x544xf32>,
    return
  }
  func.func @transform_0(%arg0: i32) -> (i32, i32) {
    %c0_i32 = arith.constant 0 : i32
    %c0_i32_0 = arith.constant 0 : i32
    return %arg0, %c0_i32 : i32, i32
  }
  func.func @transform_1(%arg0: i32) -> (i32, i32) {
    %c0_i32 = arith.constant 0 : i32
    %c0_i32_0 = arith.constant 0 : i32
    %c0_i32_1 = arith.constant 0 : i32
    return %c0_i32, %c0_i32_0 : i32, i32
  }
  func.func @transform_2(%arg0: i32) -> (i32, i32) {
    %c0_i32 = arith.constant 0 : i32
    %c0_i32_0 = arith.constant 0 : i32
    return %arg0, %c0_i32 : i32, i32
  }
}

</mosaic_0001>

<llo_original>
// kernel: tpu_custom_call.1
$region0: #{tpu_custom_call.1}
  #allocation0 [shape = 'u32[]', space=smem, size = 0x4, offset = 0x4, fixed_abs, tag = 'smem constant byte address 0x4 - core index']
  #allocation1 [shape = 'u32[144,128]{1,0:T(1,128)}', space=vmem, size = 0x12000, scoped, tag = 'internal scratch']
  %s0 = inlined_call_operand.vmem [shape: s32[2,1], index: 0, kind: input, shape index: {}]
  %s1 = inlined_call_operand.hbm [shape: f32[24,544], index: 1, kind: input, shape index: {}]
  %s2 = inlined_call_operand.hbm [shape: f32[2,544], index: 2, kind: output, shape index: {}]
  %s3 = sld [smem:[#allocation0]]
  $region22: #{tpu_custom_call.1} parent=0
    _
  %s5 = ssub.s32 1, %s3
  %s6 = scalar_select 0, %s5, %s3
  $region1: #{tpu_custom_call.1} parent=0
    #allocation2 [shape = 'u8[61440]{0}', space=vmem, size = 0xf000, scoped, tag = 'input window, operand 1, single buffered']
    #allocation3 [shape = 's32[1]{0}', space=sflag, size = 0x4, scoped, tag = 'scoped memory for tpu_custom_call.1']
    #allocation4 [shape = 's32[1]{0}', space=sflag, size = 0x4, scoped, tag = 'scoped memory for tpu_custom_call.1']
    #allocation5 [shape = 'u8[20480]{0}', space=vmem, size = 0x5000, scoped, tag = 'output window, operand 0, single buffered']
    %7 = vsyncpa [#allocation3], 0
    %8 = vsyncpa [#allocation4], 0
    // Predicated region
    $region2: #{tpu_custom_call.1} parent=1 // pred_check
      _
    $region3: #{tpu_custom_call.1} parent=1 // pred_check_branch
      %10 = sbr.rel (0) target = $region5
    $region4: #{tpu_custom_call.1} parent=1 // pred_region
      _
    $region5: #{tpu_custom_call.1} parent=1 // pred_fallthru
      _
    // Predicated region
    $region6: #{tpu_custom_call.1} parent=1 // pred_check
      _
    $region7: #{tpu_custom_call.1} parent=1 // pred_check_branch
      %12 = sbr.rel (0) target = $region9
    $region8: #{tpu_custom_call.1} parent=1 // pred_region
      %s14 = ssub.s32 1920, 1920
      %15 = vsyncadd [#allocation3], %s14
      %s16 = sshll.u32 [#allocation2], 4
      %s17 = int_to_ptr.vmem [resolvable:$true] %s16
      %22 = dma.hbm_to_vmem [thread:$0]  %s1, 1920, %s17, [#allocation3], 640, 640, 40
    $region9: #{tpu_custom_call.1} parent=1 // pred_fallthru
      _
    // Predicated region
    $region10: #{tpu_custom_call.1} parent=1 // pred_check
      _
    $region11: #{tpu_custom_call.1} parent=1 // pred_check_branch
      %24 = sbr.rel (0) target = $region13
    $region12: #{tpu_custom_call.1} parent=1 // pred_region
      %25 = dma.done [#allocation3], 1920
    $region13: #{tpu_custom_call.1} parent=1 // pred_fallthru
      _
    %v26 = vld [vmem:[%s0] sm:$0xff]
    %v27 = vsub.s32 %v26, 1
    %vm28 = vcmp.gt.s32.totalorder %v27, 0
    %v29 = vsel %vm28, %v27, 0
    %vm30 = vcmp.lt.s32.totalorder %v29, 23
    %v31 = vsel %vm30, %v29, 23
    %v32 = vlaneseq
    %v33 = vand.u32 %v32, 127
    %34 = vset.pattern.permute.xlu0 0
    %35 = vperm.xlu0 %34, %v31
    %v36 = vpop.permute.xlu0 %35
    %vm37 = vcmp.eq.s32.totalorder %v33, %v36
    %v38 = vsel %vm37, 1, 0
    %v39 = vcvt.s32.f32 %v38
    %v40 = vld [vmem:[#allocation2] sm:$0xff]
    %v41 = vld [vmem:[#allocation2 + $0x8] sm:$0xff]
    %v42 = vld [vmem:[#allocation2 + $0x10] sm:$0xff]
    %v43 = vld [vmem:[#allocation2 + $0x18] sm:$0xff]
    %v44 = vld [vmem:[#allocation2 + $0x20] sm:$0xff]
    %v45 = vld [vmem:[#allocation2 + $0x28] sm:$0xff]
    %v46 = vld [vmem:[#allocation2 + $0x30] sm:$0xff]
    %v47 = vld [vmem:[#allocation2 + $0x38] sm:$0xff]
    %v48 = vld [vmem:[#allocation2 + $0x40] sm:$0xff]
    %v49 = vld [vmem:[#allocation2 + $0x48] sm:$0xff]
    %v50 = vld [vmem:[#allocation2 + $0x50] sm:$0xff]
    %v51 = vld [vmem:[#allocation2 + $0x58] sm:$0xff]
    %v52 = vld [vmem:[#allocation2 + $0x60] sm:$0xff]
    %v53 = vld [vmem:[#allocation2 + $0x68] sm:$0xff]
    %v54 = vld [vmem:[#allocation2 + $0x70] sm:$0xff]
    %vm55 = vcmask 195584
    %v57 = vsel %vm55, %v39, 0
    %v59 = vand.u32 %v41, 4294901760
    %60 = vmatprep.subr.mxu0 %v59
    %v61 = vand.u32 %v40, 4294901760
    %62 = vmatpush1.msra.mxu0 %v61
    %v63 = vand.u32 %v46, 4294901760
    %64 = vmatprep.subr.mxu0 %v63
    %v65 = vand.u32 %v45, 4294901760
    %66 = vmatpush1.msra.mxu0 %v65
    %v67 = vand.u32 %v51, 4294901760
    %68 = vmatprep.subr.mxu0 %v67
    %v69 = vand.u32 %v50, 4294901760
    %70 = vmatpush1.msra.mxu0 %v69
    %71 = vmatprep.subr.mxu0 0.0
    %72 = vmatpush1.msra.mxu0 0.0
    %73 = vmatprep.subr.mxu0 0.0
    %74 = vmatpush1.msra.mxu0 0.0
    %75 = vmatprep.subr.mxu0 0.0
    %76 = vmatpush1.msra.mxu0 0.0
    %77 = vmatprep.subr.mxu0 0.0
    %78 = vmatpush1.msra.mxu0 0.0
    %79 = vmatprep.subr.mxu0 0.0
    %80 = vmatpush1.msra.mxu0 0.0
    %81 = vmatprep.subr.mxu0 0.0
    %82 = vmatpush1.msra.mxu0 0.0
    %83 = vmatprep.subr.mxu0 0.0
    %84 = vmatpush1.msra.mxu0 0.0
    %85 = vmatprep.subr.mxu0 0.0
    %86 = vmatpush1.msra.mxu0 0.0
    %87 = vmatprep.subr.mxu0 0.0
    %88 = vmatpush1.msra.mxu0 0.0
    %89 = vmatprep.subr.mxu0 0.0
    %90 = vmatpush1.msra.mxu0 0.0
    %91 = vmatprep.subr.mxu0 0.0
    %92 = vmatpush1.msra.mxu0 0.0
    %93 = vmatprep.subr.mxu0 0.0
    %94 = vmatpush1.msra.mxu0 0.0
    %95 = vmatprep.subr.mxu0 0.0
    %96 = vmatpush1.msra.mxu0 0.0
    %97 = vmatprep.subr.mxu0 0.0
    %98 = vmatpush1.msra.mxu0 0.0
    %99 = vmatprep.subr.mxu0 0.0
    %100 = vmatpush1.msra.mxu0 0.0
    %101 = vmatprep.subr.mxu0 0.0
    %102 = vmatpush1.msra.mxu0 0.0
    %103 = vmatprep.subr.mxu0 0.0
    %104 = vmatpush1.msra.mxu0 0.0
    %105 = vmatprep.subr.mxu0 0.0
    %106 = vmatpush1.msra.mxu0 0.0
    %107 = vmatprep.subr.mxu0 0.0
    %108 = vmatpush1.msra.mxu0 0.0
    %109 = vmatprep.subr.mxu0 0.0
    %110 = vmatpush1.msra.mxu0 0.0
    %111 = vmatprep.subr.mxu0 0.0
    %112 = vmatpush1.msra.mxu0 0.0
    %113 = vmatprep.subr.mxu0 0.0
    %114 = vmatpush1.msra.mxu0 0.0
    %115 = vmatprep.subr.mxu0 0.0
    %116 = vmatpush1.msra.mxu0 0.0
    %117 = vmatprep.subr.mxu0 0.0
    %118 = vmatpush1.msra.mxu0 0.0
    %119 = vmatprep.subr.mxu0 0.0
    %120 = vmatpush1.msra.mxu0 0.0
    %121 = vmatprep.subr.mxu0 0.0
    %122 = vmatpush1.msra.mxu0 0.0
    %123 = vmatprep.subr.mxu0 0.0
    %124 = vmatpush1.msra.mxu0 0.0
    %125 = vmatprep.subr.mxu0 0.0
    %126 = vmatpush1.msra.mxu0 0.0
    %127 = vmatprep.subr.mxu0 0.0
    %128 = vmatpush1.msra.mxu0 0.0
    %129 = vmatprep.mubr.f32.mxu0 0.0
    %v130 = vand.u32 %v57, 4294901760
    %v131 = vsub.f32 %v57, %v130
    %v132 = vand.u32 %v131, 4294901760
    %v133 = vsub.f32 %v131, %v132
    %v134 = vand.u32 %v133, 4294901760
    %135 = vmatmul.mubr.f32.gmra.mrb[0].mxu0 %v134
    %v136 = vpop.f32.mrb[0].mxu0
    %v137 = vadd.f32 0.0, %v136
    %v138 = vpop.f32.mrb[0].mxu0
    %v139 = vadd.f32 0.0, %v138
    %140 = vdwg.mxu0
    %v141 = vand.u32 %v41, 4294901760
    %v142 = vsub.f32 %v41, %v141
    %v143 = vand.u32 %v142, 4294901760
    %v144 = vsub.f32 %v142, %v143
    %v145 = vand.u32 %v144, 4294901760
    %146 = vmatprep.subr.mxu0 %v145
    %v147 = vand.u32 %v40, 4294901760
    %v148 = vsub.f32 %v40, %v147
    %v149 = vand.u32 %v148, 4294901760
    %v150 = vsub.f32 %v148, %v149
    %v151 = vand.u32 %v150, 4294901760
    %152 = vmatpush1.msra.mxu0 %v151
    %v153 = vand.u32 %v46, 4294901760
    %v154 = vsub.f32 %v46, %v153
    %v155 = vand.u32 %v154, 4294901760
    %v156 = vsub.f32 %v154, %v155
    %v157 = vand.u32 %v156, 4294901760
    %158 = vmatprep.subr.mxu0 %v157
    %v159 = vand.u32 %v45, 4294901760
    %v160 = vsub.f32 %v45, %v159
    %v161 = vand.u32 %v160, 4294901760
    %v162 = vsub.f32 %v160, %v161
    %v163 = vand.u32 %v162, 4294901760
    %164 = vmatpush1.msra.mxu0 %v163
    %v165 = vand.u32 %v51, 4294901760
    %v166 = vsub.f32 %v51, %v165
    %v167 = vand.u32 %v166, 4294901760
    %v168 = vsub.f32 %v166, %v167
    %v169 = vand.u32 %v168, 4294901760
    %170 = vmatprep.subr.mxu0 %v169
    %v171 = vand.u32 %v50, 4294901760
    %v172 = vsub.f32 %v50, %v171
    %v173 = vand.u32 %v172, 4294901760
    %v174 = vsub.f32 %v172, %v173
    %v175 = vand.u32 %v174, 4294901760
    %176 = vmatpush1.msra.mxu0 %v175
    %177 = vmatprep.subr.mxu0 0.0
    %178 = vmatpush1.msra.mxu0 0.0
    %179 = vmatprep.subr.mxu0 0.0
    %180 = vmatpush1.msra.mxu0 0.0
    %181 = vmatprep.subr.mxu0 0.0
    %182 = vmatpush1.msra.mxu0 0.0
    %183 = vmatprep.subr.mxu0 0.0
    %184 = vmatpush1.msra.mxu0 0.0
    %185 = vmatprep.subr.mxu0 0.0
    %186 = vmatpush1.msra.mxu0 0.0
    %187 = vmatprep.subr.mxu0 0.0
    %188 = vmatpush1.msra.mxu0 0.0
    %189 = vmatprep.subr.mxu0 0.0
    %190 = vmatpush1.msra.mxu0 0.0
    %191 = vmatprep.subr.mxu0 0.0
    %192 = vmatpush1.msra.mxu0 0.0
    %193 = vmatprep.subr.mxu0 0.0
    %194 = vmatpush1.msra.mxu0 0.0
    %195 = vmatprep.subr.mxu0 0.0
    %196 = vmatpush1.msra.mxu0 0.0
    %197 = vmatprep.subr.mxu0 0.0
    %198 = vmatpush1.msra.mxu0 0.0
    %199 = vmatprep.subr.mxu0 0.0
    %200 = vmatpush1.msra.mxu0 0.0
    %201 = vmatprep.subr.mxu0 0.0
    %202 = vmatpush1.msra.mxu0 0.0
    %203 = vmatprep.subr.mxu0 0.0
    %204 = vmatpush1.msra.mxu0 0.0
    %205 = vmatprep.subr.mxu0 0.0
    %206 = vmatpush1.msra.mxu0 0.0
    %207 = vmatprep.subr.mxu0 0.0
    %208 = vmatpush1.msra.mxu0 0.0
    %209 = vmatprep.subr.mxu0 0.0
    %210 = vmatpush1.msra.mxu0 0.0
    %211 = vmatprep.subr.mxu0 0.0
    %212 = vmatpush1.msra.mxu0 0.0
    %213 = vmatprep.subr.mxu0 0.0
    %214 = vmatpush1.msra.mxu0 0.0
    %215 = vmatprep.subr.mxu0 0.0
    %216 = vmatpush1.msra.mxu0 0.0
    %217 = vmatprep.subr.mxu0 0.0
    %218 = vmatpush1.msra.mxu0 0.0
    %219 = vmatprep.subr.mxu0 0.0
    %220 = vmatpush1.msra.mxu0 0.0
    %221 = vmatprep.subr.mxu0 0.0
    %222 = vmatpush1.msra.mxu0 0.0
    %223 = vmatprep.subr.mxu0 0.0
    %224 = vmatpush1.msra.mxu0 0.0
    %225 = vmatprep.subr.mxu0 0.0
    %226 = vmatpush1.msra.mxu0 0.0
    %227 = vmatprep.subr.mxu0 0.0
    %228 = vmatpush1.msra.mxu0 0.0
    %229 = vmatprep.subr.mxu0 0.0
    %230 = vmatpush1.msra.mxu0 0.0
    %231 = vmatprep.subr.mxu0 0.0
    %232 = vmatpush1.msra.mxu0 0.0
    %233 = vmatprep.subr.mxu0 0.0
    %234 = vmatpush1.msra.mxu0 0.0
    %235 = vmatprep.mubr.f32.mxu0 0.0
    %v236 = vand.u32 %v57, 4294901760
    %237 = vmatmul.mubr.f32.gmra.mrb[0].mxu0 %v236
    %v238 = vpop.f32.mrb[0].mxu0
    %v239 = vadd.f32 %v137, %v238
    %v240 = vpop.f32.mrb[0].mxu0
    %v241 = vadd.f32 %v139, %v240
    %242 = vdwg.mxu0
    %v243 = vand.u32 %v41, 4294901760
    %v244 = vsub.f32 %v41, %v243
    %245 = vmatprep.subr.mxu0 %v244
    %v246 = vand.u32 %v40, 4294901760
    %v247 = vsub.f32 %v40, %v246
    %248 = vmatpush1.msra.mxu0 %v247
    %v249 = vand.u32 %v46, 4294901760
    %v250 = vsub.f32 %v46, %v249
    %251 = vmatprep.subr.mxu0 %v250
    %v252 = vand.u32 %v45, 4294901760
    %v253 = vsub.f32 %v45, %v252
    %254 = vmatpush1.msra.mxu0 %v253
    %v255 = vand.u32 %v51, 4294901760
    %v256 = vsub.f32 %v51, %v255
    %257 = vmatprep.subr.mxu0 %v256
    %v258 = vand.u32 %v50, 4294901760
    %v259 = vsub.f32 %v50, %v258
    %260 = vmatpush1.msra.mxu0 %v259
    %261 = vmatprep.subr.mxu0 0.0
    %262 = vmatpush1.msra.mxu0 0.0
    %263 = vmatprep.subr.mxu0 0.0
    %264 = vmatpush1.msra.mxu0 0.0
    %265 = vmatprep.subr.mxu0 0.0
    %266 = vmatpush1.msra.mxu0 0.0
    %267 = vmatprep.subr.mxu0 0.0
    %268 = vmatpush1.msra.mxu0 0.0
    %269 = vmatprep.subr.mxu0 0.0
    %270 = vmatpush1.msra.mxu0 0.0
    %271 = vmatprep.subr.mxu0 0.0
    %272 = vmatpush1.msra.mxu0 0.0
    %273 = vmatprep.subr.mxu0 0.0
    %274 = vmatpush1.msra.mxu0 0.0
    %275 = vmatprep.subr.mxu0 0.0
    %276 = vmatpush1.msra.mxu0 0.0
    %277 = vmatprep.subr.mxu0 0.0
    %278 = vmatpush1.msra.mxu0 0.0
    %279 = vmatprep.subr.mxu0 0.0
    %280 = vmatpush1.msra.mxu0 0.0
    %281 = vmatprep.subr.mxu0 0.0
    %282 = vmatpush1.msra.mxu0 0.0
    %283 = vmatprep.subr.mxu0 0.0
    %284 = vmatpush1.msra.mxu0 0.0
    %285 = vmatprep.subr.mxu0 0.0
    %286 = vmatpush1.msra.mxu0 0.0
    %287 = vmatprep.subr.mxu0 0.0
    %288 = vmatpush1.msra.mxu0 0.0
    %289 = vmatprep.subr.mxu0 0.0
    %290 = vmatpush1.msra.mxu0 0.0
    %291 = vmatprep.subr.mxu0 0.0
    %292 = vmatpush1.msra.mxu0 0.0
    %293 = vmatprep.subr.mxu0 0.0
    %294 = vmatpush1.msra.mxu0 0.0
    %295 = vmatprep.subr.mxu0 0.0
    %296 = vmatpush1.msra.mxu0 0.0
    %297 = vmatprep.subr.mxu0 0.0
    %298 = vmatpush1.msra.mxu0 0.0
    %299 = vmatprep.subr.mxu0 0.0
    %300 = vmatpush1.msra.mxu0 0.0
    %301 = vmatprep.subr.mxu0 0.0
    %302 = vmatpush1.msra.mxu0 0.0
    %303 = vmatprep.subr.mxu0 0.0
    %304 = vmatpush1.msra.mxu0 0.0
    %305 = vmatprep.subr.mxu0 0.0
    %306 = vmatpush1.msra.mxu0 0.0
    %307 = vmatprep.subr.mxu0 0.0
    %308 = vmatpush1.msra.mxu0 0.0
    %309 = vmatprep.subr.mxu0 0.0
    %310 = vmatpush1.msra.mxu0 0.0
    %311 = vmatprep.subr.mxu0 0.0
    %312 = vmatpush1.msra.mxu0 0.0
    %313 = vmatprep.subr.mxu0 0.0
    %314 = vmatpush1.msra.mxu0 0.0
    %315 = vmatprep.subr.mxu0 0.0
    %316 = vmatpush1.msra.mxu0 0.0
    %317 = vmatprep.subr.mxu0 0.0
    %318 = vmatpush1.msra.mxu0 0.0
    %319 = vmatprep.mubr.f32.mxu0 0.0
    %v320 = vand.u32 %v57, 4294901760
    %v321 = vsub.f32 %v57, %v320
    %322 = vmatmul.mubr.f32.gmra.mrb[0].mxu0 %v321
    %v323 = vpop.f32.mrb[0].mxu0
    %v324 = vadd.f32 %v239, %v323
    %v325 = vpop.f32.mrb[0].mxu0
    %v326 = vadd.f32 %v241, %v325
    %327 = vdwg.mxu0
    %v328 = vand.u32 %v41, 4294901760
    %329 = vmatprep.subr.mxu0 %v328
    %v330 = vand.u32 %v40, 4294901760
    %331 = vmatpush1.msra.mxu0 %v330
    %v332 = vand.u32 %v46, 4294901760
    %333 = vmatprep.subr.mxu0 %v332
    %v334 = vand.u32 %v45, 4294901760
    %335 = vmatpush1.msra.mxu0 %v334
    %v336 = vand.u32 %v51, 4294901760
    %337 = vmatprep.subr.mxu0 %v336
    %v338 = vand.u32 %v50, 4294901760
    %339 = vmatpush1.msra.mxu0 %v338
    %340 = vmatprep.subr.mxu0 0.0
    %341 = vmatpush1.msra.mxu0 0.0
    %342 = vmatprep.subr.mxu0 0.0
    %343 = vmatpush1.msra.mxu0 0.0
    %344 = vmatprep.subr.mxu0 0.0
    %345 = vmatpush1.msra.mxu0 0.0
    %346 = vmatprep.subr.mxu0 0.0
    %347 = vmatpush1.msra.mxu0 0.0
    %348 = vmatprep.subr.mxu0 0.0
    %349 = vmatpush1.msra.mxu0 0.0
    %350 = vmatprep.subr.mxu0 0.0
    %351 = vmatpush1.msra.mxu0 0.0
    %352 = vmatprep.subr.mxu0 0.0
    %353 = vmatpush1.msra.mxu0 0.0
    %354 = vmatprep.subr.mxu0 0.0
    %355 = vmatpush1.msra.mxu0 0.0
    %356 = vmatprep.subr.mxu0 0.0
    %357 = vmatpush1.msra.mxu0 0.0
    %358 = vmatprep.subr.mxu0 0.0
    %359 = vmatpush1.msra.mxu0 0.0
    %360 = vmatprep.subr.mxu0 0.0
    %361 = vmatpush1.msra.mxu0 0.0
    %362 = vmatprep.subr.mxu0 0.0
    %363 = vmatpush1.msra.mxu0 0.0
    %364 = vmatprep.subr.mxu0 0.0
    %365 = vmatpush1.msra.mxu0 0.0
    %366 = vmatprep.subr.mxu0 0.0
    %367 = vmatpush1.msra.mxu0 0.0
    %368 = vmatprep.subr.mxu0 0.0
    %369 = vmatpush1.msra.mxu0 0.0
    %370 = vmatprep.subr.mxu0 0.0
    %371 = vmatpush1.msra.mxu0 0.0
    %372 = vmatprep.subr.mxu0 0.0
    %373 = vmatpush1.msra.mxu0 0.0
    %374 = vmatprep.subr.mxu0 0.0
    %375 = vmatpush1.msra.mxu0 0.0
    %376 = vmatprep.subr.mxu0 0.0
    %377 = vmatpush1.msra.mxu0 0.0
    %378 = vmatprep.subr.mxu0 0.0
    %379 = vmatpush1.msra.mxu0 0.0
    %380 = vmatprep.subr.mxu0 0.0
    %381 = vmatpush1.msra.mxu0 0.0
    %382 = vmatprep.subr.mxu0 0.0
    %383 = vmatpush1.msra.mxu0 0.0
    %384 = vmatprep.subr.mxu0 0.0
    %385 = vmatpush1.msra.mxu0 0.0
    %386 = vmatprep.subr.mxu0 0.0
    %387 = vmatpush1.msra.mxu0 0.0
    %388 = vmatprep.subr.mxu0 0.0
    %389 = vmatpush1.msra.mxu0 0.0
    %390 = vmatprep.subr.mxu0 0.0
    %391 = vmatpush1.msra.mxu0 0.0
    %392 = vmatprep.subr.mxu0 0.0
    %393 = vmatpush1.msra.mxu0 0.0
    %394 = vmatprep.subr.mxu0 0.0
    %395 = vmatpush1.msra.mxu0 0.0
    %396 = vmatprep.subr.mxu0 0.0
    %397 = vmatpush1.msra.mxu0 0.0
    %398 = vmatprep.mubr.f32.mxu0 0.0
    %v399 = vand.u32 %v57, 4294901760
    %v400 = vsub.f32 %v57, %v399
    %v401 = vand.u32 %v400, 4294901760
    %402 = vmatmul.mubr.f32.gmra.mrb[0].mxu0 %v401
    %v403 = vpop.f32.mrb[0].mxu0
    %v404 = vadd.f32 %v324, %v403
    %v405 = vpop.f32.mrb[0].mxu0
    %v406 = vadd.f32 %v326, %v405
    %407 = vdwg.mxu0
    %v408 = vand.u32 %v41, 4294901760
    %v409 = vsub.f32 %v41, %v408
    %v410 = vand.u32 %v409, 4294901760
    %411 = vmatprep.subr.mxu0 %v410
    %v412 = vand.u32 %v40, 4294901760
    %v413 = vsub.f32 %v40, %v412
    %v414 = vand.u32 %v413, 4294901760
    %415 = vmatpush1.msra.mxu0 %v414
    %v416 = vand.u32 %v46, 4294901760
    %v417 = vsub.f32 %v46, %v416
    %v418 = vand.u32 %v417, 4294901760
    %419 = vmatprep.subr.mxu0 %v418
    %v420 = vand.u32 %v45, 4294901760
    %v421 = vsub.f32 %v45, %v420
    %v422 = vand.u32 %v421, 4294901760
    %423 = vmatpush1.msra.mxu0 %v422
    %v424 = vand.u32 %v51, 4294901760
    %v425 = vsub.f32 %v51, %v424
    %v426 = vand.u32 %v425, 4294901760
    %427 = vmatprep.subr.mxu0 %v426
    %v428 = vand.u32 %v50, 4294901760
    %v429 = vsub.f32 %v50, %v428
    %v430 = vand.u32 %v429, 4294901760
    %431 = vmatpush1.msra.mxu0 %v430
    %432 = vmatprep.subr.mxu0 0.0
    %433 = vmatpush1.msra.mxu0 0.0
    %434 = vmatprep.subr.mxu0 0.0
    %435 = vmatpush1.msra.mxu0 0.0
    %436 = vmatprep.subr.mxu0 0.0
    %437 = vmatpush1.msra.mxu0 0.0
    %438 = vmatprep.subr.mxu0 0.0
    %439 = vmatpush1.msra.mxu0 0.0
    %440 = vmatprep.subr.mxu0 0.0
    %441 = vmatpush1.msra.mxu0 0.0
    %442 = vmatprep.subr.mxu0 0.0
    %443 = vmatpush1.msra.mxu0 0.0
    %444 = vmatprep.subr.mxu0 0.0
    %445 = vmatpush1.msra.mxu0 0.0
    %446 = vmatprep.subr.mxu0 0.0
    %447 = vmatpush1.msra.mxu0 0.0
    %448 = vmatprep.subr.mxu0 0.0
    %449 = vmatpush1.msra.mxu0 0.0
    %450 = vmatprep.subr.mxu0 0.0
    %451 = vmatpush1.msra.mxu0 0.0
    %452 = vmatprep.subr.mxu0 0.0
    %453 = vmatpush1.msra.mxu0 0.0
    %454 = vmatprep.subr.mxu0 0.0
    %455 = vmatpush1.msra.mxu0 0.0
    %456 = vmatprep.subr.mxu0 0.0
    %457 = vmatpush1.msra.mxu0 0.0
    %458 = vmatprep.subr.mxu0 0.0
    %459 = vmatpush1.msra.mxu0 0.0
    %460 = vmatprep.subr.mxu0 0.0
    %461 = vmatpush1.msra.mxu0 0.0
    %462 = vmatprep.subr.mxu0 0.0
    %463 = vmatpush1.msra.mxu0 0.0
    %464 = vmatprep.subr.mxu0 0.0
    %465 = vmatpush1.msra.mxu0 0.0
    %466 = vmatprep.subr.mxu0 0.0
    %467 = vmatpush1.msra.mxu0 0.0
    %468 = vmatprep.subr.mxu0 0.0
    %469 = vmatpush1.msra.mxu0 0.0
    %470 = vmatprep.subr.mxu0 0.0
    %471 = vmatpush1.msra.mxu0 0.0
    %472 = vmatprep.subr.mxu0 0.0
    %473 = vmatpush1.msra.mxu0 0.0
    %474 = vmatprep.subr.mxu0 0.0
    %475 = vmatpush1.msra.mxu0 0.0
    %476 = vmatprep.subr.mxu0 0.0
    %477 = vmatpush1.msra.mxu0 0.0
    %478 = vmatprep.subr.mxu0 0.0
    %479 = vmatpush1.msra.mxu0 0.0
    %480 = vmatprep.subr.mxu0 0.0
    %481 = vmatpush1.msra.mxu0 0.0
    %482 = vmatprep.subr.mxu0 0.0
    %483 = vmatpush1.msra.mxu0 0.0
    %484 = vmatprep.subr.mxu0 0.0
    %485 = vmatpush1.msra.mxu0 0.0
    %486 = vmatprep.subr.mxu0 0.0
    %487 = vmatpush1.msra.mxu0 0.0
    %488 = vmatprep.subr.mxu0 0.0
    %489 = vmatpush1.msra.mxu0 0.0
    %490 = vmatprep.mubr.f32.mxu0 0.0
    %v491 = vand.u32 %v57, 4294901760
    %492 = vmatmul.mubr.f32.gmra.mrb[0].mxu0 %v491
    %v493 = vpop.f32.mrb[0].mxu0
    %v494 = vadd.f32 %v404, %v493
    %v495 = vpop.f32.mrb[0].mxu0
    %v496 = vadd.f32 %v406, %v495
    %497 = vdwg.mxu0
    %v498 = vand.u32 %v41, 4294901760
    %499 = vmatprep.subr.mxu0 %v498
    %v500 = vand.u32 %v40, 4294901760
    %501 = vmatpush1.msra.mxu0 %v500
    %v502 = vand.u32 %v46, 4294901760
    %503 = vmatprep.subr.mxu0 %v502
    %v504 = vand.u32 %v45, 4294901760
    %505 = vmatpush1.msra.mxu0 %v504
    %v506 = vand.u32 %v51, 4294901760
    %507 = vmatprep.subr.mxu0 %v506
    %v508 = vand.u32 %v50, 4294901760
    %509 = vmatpush1.msra.mxu0 %v508
    %510 = vmatprep.subr.mxu0 0.0
    %511 = vmatpush1.msra.mxu0 0.0
    %512 = vmatprep.subr.mxu0 0.0
    %513 = vmatpush1.msra.mxu0 0.0
    %514 = vmatprep.subr.mxu0 0.0
    %515 = vmatpush1.msra.mxu0 0.0
    %516 = vmatprep.subr.mxu0 0.0
    %517 = vmatpush1.msra.mxu0 0.0
    %518 = vmatprep.subr.mxu0 0.0
    %519 = vmatpush1.msra.mxu0 0.0
    %520 = vmatprep.subr.mxu0 0.0
    %521 = vmatpush1.msra.mxu0 0.0
    %522 = vmatprep.subr.mxu0 0.0
    %523 = vmatpush1.msra.mxu0 0.0
    %524 = vmatprep.subr.mxu0 0.0
    %525 = vmatpush1.msra.mxu0 0.0
    %526 = vmatprep.subr.mxu0 0.0
    %527 = vmatpush1.msra.mxu0 0.0
    %528 = vmatprep.subr.mxu0 0.0
    %529 = vmatpush1.msra.mxu0 0.0
    %530 = vmatprep.subr.mxu0 0.0
    %531 = vmatpush1.msra.mxu0 0.0
    %532 = vmatprep.subr.mxu0 0.0
    %533 = vmatpush1.msra.mxu0 0.0
    %534 = vmatprep.subr.mxu0 0.0
    %535 = vmatpush1.msra.mxu0 0.0
    %536 = vmatprep.subr.mxu0 0.0
    %537 = vmatpush1.msra.mxu0 0.0
    %538 = vmatprep.subr.mxu0 0.0
    %539 = vmatpush1.msra.mxu0 0.0
    %540 = vmatprep.subr.mxu0 0.0
    %541 = vmatpush1.msra.mxu0 0.0
    %542 = vmatprep.subr.mxu0 0.0
    %543 = vmatpush1.msra.mxu0 0.0
    %544 = vmatprep.subr.mxu0 0.0
    %545 = vmatpush1.msra.mxu0 0.0
    %546 = vmatprep.subr.mxu0 0.0
    %547 = vmatpush1.msra.mxu0 0.0
    %548 = vmatprep.subr.mxu0 0.0
    %549 = vmatpush1.msra.mxu0 0.0
    %550 = vmatprep.subr.mxu0 0.0
    %551 = vmatpush1.msra.mxu0 0.0
    %552 = vmatprep.subr.mxu0 0.0
    %553 = vmatpush1.msra.mxu0 0.0
    %554 = vmatprep.subr.mxu0 0.0
    %555 = vmatpush1.msra.mxu0 0.0
    %556 = vmatprep.subr.mxu0 0.0
    %557 = vmatpush1.msra.mxu0 0.0
    %558 = vmatprep.subr.mxu0 0.0
    %559 = vmatpush1.msra.mxu0 0.0
    %560 = vmatprep.subr.mxu0 0.0
    %561 = vmatpush1.msra.mxu0 0.0
    %562 = vmatprep.subr.mxu0 0.0
    %563 = vmatpush1.msra.mxu0 0.0
    %564 = vmatprep.subr.mxu0 0.0
    %565 = vmatpush1.msra.mxu0 0.0
    %566 = vmatprep.subr.mxu0 0.0
    %567 = vmatpush1.msra.mxu0 0.0
    %568 = vmatprep.mubr.f32.mxu0 0.0
    %v569 = vand.u32 %v57, 4294901760
    %570 = vmatmul.mubr.f32.gmra.mrb[0].mxu0 %v569
    %v571 = vpop.f32.mrb[0].mxu0
    %v572 = vadd.f32 %v494, %v571
    %v573 = vpop.f32.mrb[0].mxu0
    %v574 = vadd.f32 %v496, %v573
    %575 = vdwg.mxu0
    %v576 = vand.u32 %v43, 4294901760
    %577 = vmatprep.subr.mxu0 %v576
    %v578 = vand.u32 %v42, 4294901760
    %579 = vmatpush1.msra.mxu0 %v578
    %v580 = vand.u32 %v48, 4294901760
    %581 = vmatprep.subr.mxu0 %v580
    %v582 = vand.u32 %v47, 4294901760
    %583 = vmatpush1.msra.mxu0 %v582
    %v584 = vand.u32 %v53, 4294901760
    %585 = vmatprep.subr.mxu0 %v584
    %v586 = vand.u32 %v52, 4294901760
    %587 = vmatpush1.msra.mxu0 %v586
    %588 = vmatprep.subr.mxu0 0.0
    %589 = vmatpush1.msra.mxu0 0.0
    %590 = vmatprep.subr.mxu0 0.0
    %591 = vmatpush1.msra.mxu0 0.0
    %592 = vmatprep.subr.mxu0 0.0
    %593 = vmatpush1.msra.mxu0 0.0
    %594 = vmatprep.subr.mxu0 0.0
    %595 = vmatpush1.msra.mxu0 0.0
    %596 = vmatprep.subr.mxu0 0.0
    %597 = vmatpush1.msra.mxu0 0.0
    %598 = vmatprep.subr.mxu0 0.0
    %599 = vmatpush1.msra.mxu0 0.0
    %600 = vmatprep.subr.mxu0 0.0
    %601 = vmatpush1.msra.mxu0 0.0
    %602 = vmatprep.subr.mxu0 0.0
    %603 = vmatpush1.msra.mxu0 0.0
    %604 = vmatprep.subr.mxu0 0.0
    %605 = vmatpush1.msra.mxu0 0.0
    %606 = vmatprep.subr.mxu0 0.0
    %607 = vmatpush1.msra.mxu0 0.0
    %608 = vmatprep.subr.mxu0 0.0
    %609 = vmatpush1.msra.mxu0 0.0
    %610 = vmatprep.subr.mxu0 0.0
    %611 = vmatpush1.msra.mxu0 0.0
    %612 = vmatprep.subr.mxu0 0.0
    %613 = vmatpush1.msra.mxu0 0.0
    %614 = vmatprep.subr.mxu0 0.0
    %615 = vmatpush1.msra.mxu0 0.0
    %616 = vmatprep.subr.mxu0 0.0
    %617 = vmatpush1.msra.mxu0 0.0
    %618 = vmatprep.subr.mxu0 0.0
    %619 = vmatpush1.msra.mxu0 0.0
    %620 = vmatprep.subr.mxu0 0.0
    %621 = vmatpush1.msra.mxu0 0.0
    %622 = vmatprep.subr.mxu0 0.0
    %623 = vmatpush1.msra.mxu0 0.0
    %624 = vmatprep.subr.mxu0 0.0
    %625 = vmatpush1.msra.mxu0 0.0
    %626 = vmatprep.subr.mxu0 0.0
    %627 = vmatpush1.msra.mxu0 0.0
    %628 = vmatprep.subr.mxu0 0.0
    %629 = vmatpush1.msra.mxu0 0.0
    %630 = vmatprep.subr.mxu0 0.0
    %631 = vmatpush1.msra.mxu0 0.0
    %632 = vmatprep.subr.mxu0 0.0
    %633 = vmatpush1.msra.mxu0 0.0
    %634 = vmatprep.subr.mxu0 0.0
    %635 = vmatpush1.msra.mxu0 0.0
    %636 = vmatprep.subr.mxu0 0.0
    %637 = vmatpush1.msra.mxu0 0.0
    %638 = vmatprep.subr.mxu0 0.0
    %639 = vmatpush1.msra.mxu0 0.0
    %640 = vmatprep.subr.mxu0 0.0
    %641 = vmatpush1.msra.mxu0 0.0
    %642 = vmatprep.subr.mxu0 0.0
    %643 = vmatpush1.msra.mxu0 0.0
    %644 = vmatprep.subr.mxu0 0.0
    %645 = vmatpush1.msra.mxu0 0.0
    %646 = vmatprep.mubr.f32.mxu0 0.0
    %v647 = vand.u32 %v57, 4294901760
    %v648 = vsub.f32 %v57, %v647
    %v649 = vand.u32 %v648, 4294901760
    %v650 = vsub.f32 %v648, %v649
    %v651 = vand.u32 %v650, 4294901760
    %652 = vmatmul.mubr.f32.gmra.mrb[0].mxu0 %v651
    %v653 = vpop.f32.mrb[0].mxu0
    %v654 = vadd.f32 0.0, %v653
    %v655 = vpop.f32.mrb[0].mxu0
    %v656 = vadd.f32 0.0, %v655
    %657 = vdwg.mxu0
    %v658 = vand.u32 %v43, 4294901760
    %v659 = vsub.f32 %v43, %v658
    %v660 = vand.u32 %v659, 4294901760
    %v661 = vsub.f32 %v659, %v660
    %v662 = vand.u32 %v661, 4294901760
    %663 = vmatprep.subr.mxu0 %v662
    %v664 = vand.u32 %v42, 4294901760
    %v665 = vsub.f32 %v42, %v664
    %v666 = vand.u32 %v665, 4294901760
    %v667 = vsub.f32 %v665, %v666
    %v668 = vand.u32 %v667, 4294901760
    %669 = vmatpush1.msra.mxu0 %v668
    %v670 = vand.u32 %v48, 4294901760
    %v671 = vsub.f32 %v48, %v670
    %v672 = vand.u32 %v671, 4294901760
    %v673 = vsub.f32 %v671, %v672
    %v674 = vand.u32 %v673, 4294901760
    %675 = vmatprep.subr.mxu0 %v674
    %v676 = vand.u32 %v47, 4294901760
    %v677 = vsub.f32 %v47, %v676
    %v678 = vand.u32 %v677, 4294901760
    %v679 = vsub.f32 %v677, %v678
    %v680 = vand.u32 %v679, 4294901760
    %681 = vmatpush1.msra.mxu0 %v680
    %v682 = vand.u32 %v53, 4294901760
    %v683 = vsub.f32 %v53, %v682
    %v684 = vand.u32 %v683, 4294901760
    %v685 = vsub.f32 %v683, %v684
    %v686 = vand.u32 %v685, 4294901760
    %687 = vmatprep.subr.mxu0 %v686
    %v688 = vand.u32 %v52, 4294901760
    %v689 = vsub.f32 %v52, %v688
    %v690 = vand.u32 %v689, 4294901760
    %v691 = vsub.f32 %v689, %v690
    %v692 = vand.u32 %v691, 4294901760
    %693 = vmatpush1.msra.mxu0 %v692
    %694 = vmatprep.subr.mxu0 0.0
    %695 = vmatpush1.msra.mxu0 0.0
    %696 = vmatprep.subr.mxu0 0.0
    %697 = vmatpush1.msra.mxu0 0.0
    %698 = vmatprep.subr.mxu0 0.0
    %699 = vmatpush1.msra.mxu0 0.0
    %700 = vmatprep.subr.mxu0 0.0
    %701 = vmatpush1.msra.mxu0 0.0
    %702 = vmatprep.subr.mxu0 0.0
    %703 = vmatpush1.msra.mxu0 0.0
    %704 = vmatprep.subr.mxu0 0.0
    %705 = vmatpush1.msra.mxu0 0.0
    %706 = vmatprep.subr.mxu0 0.0
    %707 = vmatpush1.msra.mxu0 0.0
    %708 = vmatprep.subr.mxu0 0.0
    %709 = vmatpush1.msra.mxu0 0.0
    %710 = vmatprep.subr.mxu0 0.0
    %711 = vmatpush1.msra.mxu0 0.0
    %712 = vmatprep.subr.mxu0 0.0
    %713 = vmatpush1.msra.mxu0 0.0
    %714 = vmatprep.subr.mxu0 0.0
    %715 = vmatpush1.msra.mxu0 0.0
    %716 = vmatprep.subr.mxu0 0.0
    %717 = vmatpush1.msra.mxu0 0.0
    %718 = vmatprep.subr.mxu0 0.0
    %719 = vmatpush1.msra.mxu0 0.0
    %720 = vmatprep.subr.mxu0 0.0
    %721 = vmatpush1.msra.mxu0 0.0
    %722 = vmatprep.subr.mxu0 0.0
    %723 = vmatpush1.msra.mxu0 0.0
    %724 = vmatprep.subr.mxu0 0.0
    %725 = vmatpush1.msra.mxu0 0.0
    %726 = vmatprep.subr.mxu0 0.0
    %727 = vmatpush1.msra.mxu0 0.0
    %728 = vmatprep.subr.mxu0 0.0
    %729 = vmatpush1.msra.mxu0 0.0
    %730 = vmatprep.subr.mxu0 0.0
    %731 = vmatpush1.msra.mxu0 0.0
    %732 = vmatprep.subr.mxu0 0.0
    %733 = vmatpush1.msra.mxu0 0.0
    %734 = vmatprep.subr.mxu0 0.0
    %735 = vmatpush1.msra.mxu0 0.0
    %736 = vmatprep.subr.mxu0 0.0
    %737 = vmatpush1.msra.mxu0 0.0
    %738 = vmatprep.subr.mxu0 0.0
    %739 = vmatpush1.msra.mxu0 0.0
    %740 = vmatprep.subr.mxu0 0.0
    %741 = vmatpush1.msra.mxu0 0.0
    %742 = vmatprep.subr.mxu0 0.0
    %743 = vmatpush1.msra.mxu0 0.0
    %744 = vmatprep.subr.mxu0 0.0
    %745 = vmatpush1.msra.mxu0 0.0
    %746 = vmatprep.subr.mxu0 0.0
    %747 = vmatpush1.msra.mxu0 0.0
    %748 = vmatprep.subr.mxu0 0.0
    %749 = vmatpush1.msra.mxu0 0.0
    %750 = vmatprep.subr.mxu0 0.0
    %751 = vmatpush1.msra.mxu0 0.0
    %752 = vmatprep.mubr.f32.mxu0 0.0
    %v753 = vand.u32 %v57, 4294901760
    %754 = vmatmul.mubr.f32.gmra.mrb[0].mxu0 %v753
    %v755 = vpop.f32.mrb[0].mxu0
    %v756 = vadd.f32 %v654, %v755
    %v757 = vpop.f32.mrb[0].mxu0
    %v758 = vadd.f32 %v656, %v757
    %759 = vdwg.mxu0
    %v760 = vand.u32 %v43, 4294901760
    %v761 = vsub.f32 %v43, %v760
    %762 = vmatprep.subr.mxu0 %v761
    %v763 = vand.u32 %v42, 4294901760
    %v764 = vsub.f32 %v42, %v763
    %765 = vmatpush1.msra.mxu0 %v764
    %v766 = vand.u32 %v48, 4294901760
    %v767 = vsub.f32 %v48, %v766
    %768 = vmatprep.subr.mxu0 %v767
    %v769 = vand.u32 %v47, 4294901760
    %v770 = vsub.f32 %v47, %v769
    %771 = vmatpush1.msra.mxu0 %v770
    %v772 = vand.u32 %v53, 4294901760
    %v773 = vsub.f32 %v53, %v772
    %774 = vmatprep.subr.mxu0 %v773
    %v775 = vand.u32 %v52, 4294901760
    %v776 = vsub.f32 %v52, %v775
    %777 = vmatpush1.msra.mxu0 %v776
    %778 = vmatprep.subr.mxu0 0.0
    %779 = vmatpush1.msra.mxu0 0.0
    %780 = vmatprep.subr.mxu0 0.0
    %781 = vmatpush1.msra.mxu0 0.0
    %782 = vmatprep.subr.mxu0 0.0
    %783 = vmatpush1.msra.mxu0 0.0
    %784 = vmatprep.subr.mxu0 0.0
    %785 = vmatpush1.msra.mxu0 0.0
    %786 = vmatprep.subr.mxu0 0.0
    %787 = vmatpush1.msra.mxu0 0.0
    %788 = vmatprep.subr.mxu0 0.0
    %789 = vmatpush1.msra.mxu0 0.0
    %790 = vmatprep.subr.mxu0 0.0
    %791 = vmatpush1.msra.mxu0 0.0
    %792 = vmatprep.subr.mxu0 0.0
    %793 = vmatpush1.msra.mxu0 0.0
    %794 = vmatprep.subr.mxu0 0.0
    %795 = vmatpush1.msra.mxu0 0.0
    %796 = vmatprep.subr.mxu0 0.0
    %797 = vmatpush1.msra.mxu0 0.0
    %798 = vmatprep.subr.mxu0 0.0
    %799 = vmatpush1.msra.mxu0 0.0
    %800 = vmatprep.subr.mxu0 0.0
    %801 = vmatpush1.msra.mxu0 0.0
    %802 = vmatprep.subr.mxu0 0.0
    %803 = vmatpush1.msra.mxu0 0.0
    %804 = vmatprep.subr.mxu0 0.0
    %805 = vmatpush1.msra.mxu0 0.0
    %806 = vmatprep.subr.mxu0 0.0
    %807 = vmatpush1.msra.mxu0 0.0
    %808 = vmatprep.subr.mxu0 0.0
    %809 = vmatpush1.msra.mxu0 0.0
    %810 = vmatprep.subr.mxu0 0.0
    %811 = vmatpush1.msra.mxu0 0.0
    %812 = vmatprep.subr.mxu0 0.0
    %813 = vmatpush1.msra.mxu0 0.0
    %814 = vmatprep.subr.mxu0 0.0
    %815 = vmatpush1.msra.mxu0 0.0
    %816 = vmatprep.subr.mxu0 0.0
    %817 = vmatpush1.msra.mxu0 0.0
    %818 = vmatprep.subr.mxu0 0.0
    %819 = vmatpush1.msra.mxu0 0.0
    %820 = vmatprep.subr.mxu0 0.0
    %821 = vmatpush1.msra.mxu0 0.0
    %822 = vmatprep.subr.mxu0 0.0
    %823 = vmatpush1.msra.mxu0 0.0
    %824 = vmatprep.subr.mxu0 0.0
    %825 = vmatpush1.msra.mxu0 0.0
    %826 = vmatprep.subr.mxu0 0.0
    %827 = vmatpush1.msra.mxu0 0.0
    %828 = vmatprep.subr.mxu0 0.0
    %829 = vmatpush1.msra.mxu0 0.0
    %830 = vmatprep.subr.mxu0 0.0
    %831 = vmatpush1.msra.mxu0 0.0
    %832 = vmatprep.subr.mxu0 0.0
    %833 = vmatpush1.msra.mxu0 0.0
    %834 = vmatprep.subr.mxu0 0.0
    %835 = vmatpush1.msra.mxu0 0.0
    %836 = vmatprep.mubr.f32.mxu0 0.0
    %v837 = vand.u32 %v57, 4294901760
    %v838 = vsub.f32 %v57, %v837
    %839 = vmatmul.mubr.f32.gmra.mrb[0].mxu0 %v838
    %v840 = vpop.f32.mrb[0].mxu0
    %v841 = vadd.f32 %v756, %v840
    %v842 = vpop.f32.mrb[0].mxu0
    %v843 = vadd.f32 %v758, %v842
    %844 = vdwg.mxu0
    %v845 = vand.u32 %v43, 4294901760
    %846 = vmatprep.subr.mxu0 %v845
    %v847 = vand.u32 %v42, 4294901760
    %848 = vmatpush1.msra.mxu0 %v847
    %v849 = vand.u32 %v48, 4294901760
    %850 = vmatprep.subr.mxu0 %v849
    %v851 = vand.u32 %v47, 4294901760
    %852 = vmatpush1.msra.mxu0 %v851
    %v853 = vand.u32 %v53, 4294901760
    %854 = vmatprep.subr.mxu0 %v853
    %v855 = vand.u32 %v52, 4294901760
    %856 = vmatpush1.msra.mxu0 %v855
    %857 = vmatprep.subr.mxu0 0.0
    %858 = vmatpush1.msra.mxu0 0.0
    %859 = vmatprep.subr.mxu0 0.0
    %860 = vmatpush1.msra.mxu0 0.0
    %861 = vmatprep.subr.mxu0 0.0
    %862 = vmatpush1.msra.mxu0 0.0
    %863 = vmatprep.subr.mxu0 0.0
    %864 = vmatpush1.msra.mxu0 0.0
    %865 = vmatprep.subr.mxu0 0.0
    %866 = vmatpush1.msra.mxu0 0.0
    %867 = vmatprep.subr.mxu0 0.0
    %868 = vmatpush1.msra.mxu0 0.0
    %869 = vmatprep.subr.mxu0 0.0
    %870 = vmatpush1.msra.mxu0 0.0
    %871 = vmatprep.subr.mxu0 0.0
    %872 = vmatpush1.msra.mxu0 0.0
    %873 = vmatprep.subr.mxu0 0.0
    %874 = vmatpush1.msra.mxu0 0.0
    %875 = vmatprep.subr.mxu0 0.0
    %876 = vmatpush1.msra.mxu0 0.0
    %877 = vmatprep.subr.mxu0 0.0
    %878 = vmatpush1.msra.mxu0 0.0
    %879 = vmatprep.subr.mxu0 0.0
    %880 = vmatpush1.msra.mxu0 0.0
    %881 = vmatprep.subr.mxu0 0.0
    %882 = vmatpush1.msra.mxu0 0.0
    %883 = vmatprep.subr.mxu0 0.0
    %884 = vmatpush1.msra.mxu0 0.0
    %885 = vmatprep.subr.mxu0 0.0
    %886 = vmatpush1.msra.mxu0 0.0
    %887 = vmatprep.subr.mxu0 0.0
    %888 = vmatpush1.msra.mxu0 0.0
    %889 = vmatprep.subr.mxu0 0.0
    %890 = vmatpush1.msra.mxu0 0.0
    %891 = vmatprep.subr.mxu0 0.0
    %892 = vmatpush1.msra.mxu0 0.0
    %893 = vmatprep.subr.mxu0 0.0
    %894 = vmatpush1.msra.mxu0 0.0
    %895 = vmatprep.subr.mxu0 0.0
    %896 = vmatpush1.msra.mxu0 0.0
    %897 = vmatprep.subr.mxu0 0.0
    %898 = vmatpush1.msra.mxu0 0.0
    %899 = vmatprep.subr.mxu0 0.0
    %900 = vmatpush1.msra.mxu0 0.0
    %901 = vmatprep.subr.mxu0 0.0
    %902 = vmatpush1.msra.mxu0 0.0
    %903 = vmatprep.subr.mxu0 0.0
    %904 = vmatpush1.msra.mxu0 0.0
    %905 = vmatprep.subr.mxu0 0.0
    %906 = vmatpush1.msra.mxu0 0.0
    %907 = vmatprep.subr.mxu0 0.0
    %908 = vmatpush1.msra.mxu0 0.0
    %909 = vmatprep.subr.mxu0 0.0
    %910 = vmatpush1.msra.mxu0 0.0
    %911 = vmatprep.subr.mxu0 0.0
    %912 = vmatpush1.msra.mxu0 0.0
    %913 = vmatprep.subr.mxu0 0.0
    %914 = vmatpush1.msra.mxu0 0.0
    %915 = vmatprep.mubr.f32.mxu0 0.0
    %v916 = vand.u32 %v57, 4294901760
    %v917 = vsub.f32 %v57, %v916
    %v918 = vand.u32 %v917, 4294901760
    %919 = vmatmul.mubr.f32.gmra.mrb[0].mxu0 %v918
    %v920 = vpop.f32.mrb[0].mxu0
    %v921 = vadd.f32 %v841, %v920
    %v922 = vpop.f32.mrb[0].mxu0
    %v923 = vadd.f32 %v843, %v922
    %924 = vdwg.mxu0
    %v925 = vand.u32 %v43, 4294901760
    %v926 = vsub.f32 %v43, %v925
    %v927 = vand.u32 %v926, 4294901760
    %928 = vmatprep.subr.mxu0 %v927
    %v929 = vand.u32 %v42, 4294901760
    %v930 = vsub.f32 %v42, %v929
    %v931 = vand.u32 %v930, 4294901760
    %932 = vmatpush1.msra.mxu0 %v931
    %v933 = vand.u32 %v48, 4294901760
    %v934 = vsub.f32 %v48, %v933
    %v935 = vand.u32 %v934, 4294901760
    %936 = vmatprep.subr.mxu0 %v935
    %v937 = vand.u32 %v47, 4294901760
    %v938 = vsub.f32 %v47, %v937
    %v939 = vand.u32 %v938, 4294901760
    %940 = vmatpush1.msra.mxu0 %v939
    %v941 = vand.u32 %v53, 4294901760
    %v942 = vsub.f32 %v53, %v941
    %v943 = vand.u32 %v942, 4294901760
    %944 = vmatprep.subr.mxu0 %v943
    %v945 = vand.u32 %v52, 4294901760
    %v946 = vsub.f32 %v52, %v945
    %v947 = vand.u32 %v946, 4294901760
    %948 = vmatpush1.msra.mxu0 %v947
    %949 = vmatprep.subr.mxu0 0.0
    %950 = vmatpush1.msra.mxu0 0.0
    %951 = vmatprep.subr.mxu0 0.0
    %952 = vmatpush1.msra.mxu0 0.0
    %953 = vmatprep.subr.mxu0 0.0
    %954 = vmatpush1.msra.mxu0 0.0
    %955 = vmatprep.subr.mxu0 0.0
    %956 = vmatpush1.msra.mxu0 0.0
    %957 = vmatprep.subr.mxu0 0.0
    %958 = vmatpush1.msra.mxu0 0.0
    %959 = vmatprep.subr.mxu0 0.0
    %960 = vmatpush1.msra.mxu0 0.0
    %961 = vmatprep.subr.mxu0 0.0
    %962 = vmatpush1.msra.mxu0 0.0
    %963 = vmatprep.subr.mxu0 0.0
    %964 = vmatpush1.msra.mxu0 0.0
    %965 = vmatprep.subr.mxu0 0.0
    %966 = vmatpush1.msra.mxu0 0.0
    %967 = vmatprep.subr.mxu0 0.0
    %968 = vmatpush1.msra.mxu0 0.0
    %969 = vmatprep.subr.mxu0 0.0
    %970 = vmatpush1.msra.mxu0 0.0
    %971 = vmatprep.subr.mxu0 0.0
    %972 = vmatpush1.msra.mxu0 0.0
    %973 = vmatprep.subr.mxu0 0.0
    %974 = vmatpush1.msra.mxu0 0.0
    %975 = vmatprep.subr.mxu0 0.0
    %976 = vmatpush1.msra.mxu0 0.0
    %977 = vmatprep.subr.mxu0 0.0
    %978 = vmatpush1.msra.mxu0 0.0
    %979 = vmatprep.subr.mxu0 0.0
    %980 = vmatpush1.msra.mxu0 0.0
    %981 = vmatprep.subr.mxu0 0.0
    %982 = vmatpush1.msra.mxu0 0.0
    %983 = vmatprep.subr.mxu0 0.0
    %984 = vmatpush1.msra.mxu0 0.0
    %985 = vmatprep.subr.mxu0 0.0
    %986 = vmatpush1.msra.mxu0 0.0
    %987 = vmatprep.subr.mxu0 0.0
    %988 = vmatpush1.msra.mxu0 0.0
    %989 = vmatprep.subr.mxu0 0.0
    %990 = vmatpush1.msra.mxu0 0.0
    %991 = vmatprep.subr.mxu0 0.0
    %992 = vmatpush1.msra.mxu0 0.0
    %993 = vmatprep.subr.mxu0 0.0
    %994 = vmatpush1.msra.mxu0 0.0
    %995 = vmatprep.subr.mxu0 0.0
    %996 = vmatpush1.msra.mxu0 0.0
    %997 = vmatprep.subr.mxu0 0.0
    %998 = vmatpush1.msra.mxu0 0.0
    %999 = vmatprep.subr.mxu0 0.0
    %1000 = vmatpush1.msra.mxu0 0.0
    %1001 = vmatprep.subr.mxu0 0.0
    %1002 = vmatpush1.msra.mxu0 0.0
    %1003 = vmatprep.subr.mxu0 0.0
    %1004 = vmatpush1.msra.mxu0 0.0
    %1005 = vmatprep.subr.mxu0 0.0
    %1006 = vmatpush1.msra.mxu0 0.0
    %1007 = vmatprep.mubr.f32.mxu0 0.0
    %v1008 = vand.u32 %v57, 4294901760
    %1009 = vmatmul.mubr.f32.gmra.mrb[0].mxu0 %v1008
    %v1010 = vpop.f32.mrb[0].mxu0
    %v1011 = vadd.f32 %v921, %v1010
    %v1012 = vpop.f32.mrb[0].mxu0
    %v1013 = vadd.f32 %v923, %v1012
    %1014 = vdwg.mxu0
    %v1015 = vand.u32 %v43, 4294901760
    %1016 = vmatprep.subr.mxu0 %v1015
    %v1017 = vand.u32 %v42, 4294901760
    %1018 = vmatpush1.msra.mxu0 %v1017
    %v1019 = vand.u32 %v48, 4294901760
    %1020 = vmatprep.subr.mxu0 %v1019
    %v1021 = vand.u32 %v47, 4294901760
    %1022 = vmatpush1.msra.mxu0 %v1021
    %v1023 = vand.u32 %v53, 4294901760
    %1024 = vmatprep.subr.mxu0 %v1023
    %v1025 = vand.u32 %v52, 4294901760
    %1026 = vmatpush1.msra.mxu0 %v1025
    %1027 = vmatprep.subr.mxu0 0.0
    %1028 = vmatpush1.msra.mxu0 0.0
    %1029 = vmatprep.subr.mxu0 0.0
    %1030 = vmatpush1.msra.mxu0 0.0
    %1031 = vmatprep.subr.mxu0 0.0
    %1032 = vmatpush1.msra.mxu0 0.0
    %1033 = vmatprep.subr.mxu0 0.0
    %1034 = vmatpush1.msra.mxu0 0.0
    %1035 = vmatprep.subr.mxu0 0.0
    %1036 = vmatpush1.msra.mxu0 0.0
    %1037 = vmatprep.subr.mxu0 0.0
    %1038 = vmatpush1.msra.mxu0 0.0
    %1039 = vmatprep.subr.mxu0 0.0
    %1040 = vmatpush1.msra.mxu0 0.0
    %1041 = vmatprep.subr.mxu0 0.0
    %1042 = vmatpush1.msra.mxu0 0.0
    %1043 = vmatprep.subr.mxu0 0.0
    %1044 = vmatpush1.msra.mxu0 0.0
    %1045 = vmatprep.subr.mxu0 0.0
    %1046 = vmatpush1.msra.mxu0 0.0
    %1047 = vmatprep.subr.mxu0 0.0
    %1048 = vmatpush1.msra.mxu0 0.0
    %1049 = vmatprep.subr.mxu0 0.0
    %1050 = vmatpush1.msra.mxu0 0.0
    %1051 = vmatprep.subr.mxu0 0.0
    %1052 = vmatpush1.msra.mxu0 0.0
    %1053 = vmatprep.subr.mxu0 0.0
    %1054 = vmatpush1.msra.mxu0 0.0
    %1055 = vmatprep.subr.mxu0 0.0
    %1056 = vmatpush1.msra.mxu0 0.0
    %1057 = vmatprep.subr.mxu0 0.0
    %1058 = vmatpush1.msra.mxu0 0.0
    %1059 = vmatprep.subr.mxu0 0.0
    %1060 = vmatpush1.msra.mxu0 0.0
    %1061 = vmatprep.subr.mxu0 0.0
    %1062 = vmatpush1.msra.mxu0 0.0
    %1063 = vmatprep.subr.mxu0 0.0
    %1064 = vmatpush1.msra.mxu0 0.0
    %1065 = vmatprep.subr.mxu0 0.0
    %1066 = vmatpush1.msra.mxu0 0.0
    %1067 = vmatprep.subr.mxu0 0.0
    %1068 = vmatpush1.msra.mxu0 0.0
    %1069 = vmatprep.subr.mxu0 0.0
    %1070 = vmatpush1.msra.mxu0 0.0
    %1071 = vmatprep.subr.mxu0 0.0
    %1072 = vmatpush1.msra.mxu0 0.0
    %1073 = vmatprep.subr.mxu0 0.0
    %1074 = vmatpush1.msra.mxu0 0.0
    %1075 = vmatprep.subr.mxu0 0.0
    %1076 = vmatpush1.msra.mxu0 0.0
    %1077 = vmatprep.subr.mxu0 0.0
    %1078 = vmatpush1.msra.mxu0 0.0
    %1079 = vmatprep.subr.mxu0 0.0
    %1080 = vmatpush1.msra.mxu0 0.0
    %1081 = vmatprep.subr.mxu0 0.0
    %1082 = vmatpush1.msra.mxu0 0.0
    %1083 = vmatprep.subr.mxu0 0.0
    %1084 = vmatpush1.msra.mxu0 0.0
    %1085 = vmatprep.mubr.f32.mxu0 0.0
    %v1086 = vand.u32 %v57, 4294901760
    %1087 = vmatmul.mubr.f32.gmra.mrb[0].mxu0 %v1086
    %v1088 = vpop.f32.mrb[0].mxu0
    %v1089 = vadd.f32 %v1011, %v1088
    %v1090 = vpop.f32.mrb[0].mxu0
    %v1091 = vadd.f32 %v1013, %v1090
    %1092 = vdwg.mxu0
    %1093 = vmatprep.subr.mxu0 0.0
    %v1094 = vand.u32 %v44, 4294901760
    %1095 = vmatpush1.msra.mxu0 %v1094
    %1096 = vmatprep.subr.mxu0 0.0
    %v1097 = vand.u32 %v49, 4294901760
    %1098 = vmatpush1.msra.mxu0 %v1097
    %1099 = vmatprep.subr.mxu0 0.0
    %v1100 = vand.u32 %v54, 4294901760
    %1101 = vmatpush1.msra.mxu0 %v1100
    %1102 = vmatprep.subr.mxu0 0.0
    %1103 = vmatpush1.msra.mxu0 0.0
    %1104 = vmatprep.subr.mxu0 0.0
    %1105 = vmatpush1.msra.mxu0 0.0
    %1106 = vmatprep.subr.mxu0 0.0
    %1107 = vmatpush1.msra.mxu0 0.0
    %1108 = vmatprep.subr.mxu0 0.0
    %1109 = vmatpush1.msra.mxu0 0.0
    %1110 = vmatprep.subr.mxu0 0.0
    %1111 = vmatpush1.msra.mxu0 0.0
    %1112 = vmatprep.subr.mxu0 0.0
    %1113 = vmatpush1.msra.mxu0 0.0
    %1114 = vmatprep.subr.mxu0 0.0
    %1115 = vmatpush1.msra.mxu0 0.0
    %1116 = vmatprep.subr.mxu0 0.0
    %1117 = vmatpush1.msra.mxu0 0.0
    %1118 = vmatprep.subr.mxu0 0.0
    %1119 = vmatpush1.msra.mxu0 0.0
    %1120 = vmatprep.subr.mxu0 0.0
    %1121 = vmatpush1.msra.mxu0 0.0
    %1122 = vmatprep.subr.mxu0 0.0
    %1123 = vmatpush1.msra.mxu0 0.0
    %1124 = vmatprep.subr.mxu0 0.0
    %1125 = vmatpush1.msra.mxu0 0.0
    %1126 = vmatprep.subr.mxu0 0.0
    %1127 = vmatpush1.msra.mxu0 0.0
    %1128 = vmatprep.subr.mxu0 0.0
    %1129 = vmatpush1.msra.mxu0 0.0
    %1130 = vmatprep.subr.mxu0 0.0
    %1131 = vmatpush1.msra.mxu0 0.0
    %1132 = vmatprep.subr.mxu0 0.0
    %1133 = vmatpush1.msra.mxu0 0.0
    %1134 = vmatprep.subr.mxu0 0.0
    %1135 = vmatpush1.msra.mxu0 0.0
    %1136 = vmatprep.subr.mxu0 0.0
    %1137 = vmatpush1.msra.mxu0 0.0
    %1138 = vmatprep.subr.mxu0 0.0
    %1139 = vmatpush1.msra.mxu0 0.0
    %1140 = vmatprep.subr.mxu0 0.0
    %1141 = vmatpush1.msra.mxu0 0.0
    %1142 = vmatprep.subr.mxu0 0.0
    %1143 = vmatpush1.msra.mxu0 0.0
    %1144 = vmatprep.subr.mxu0 0.0
    %1145 = vmatpush1.msra.mxu0 0.0
    %1146 = vmatprep.subr.mxu0 0.0
    %1147 = vmatpush1.msra.mxu0 0.0
    %1148 = vmatprep.subr.mxu0 0.0
    %1149 = vmatpush1.msra.mxu0 0.0
    %1150 = vmatprep.subr.mxu0 0.0
    %1151 = vmatpush1.msra.mxu0 0.0
    %1152 = vmatprep.subr.mxu0 0.0
    %1153 = vmatpush1.msra.mxu0 0.0
    %1154 = vmatprep.subr.mxu0 0.0
    %1155 = vmatpush1.msra.mxu0 0.0
    %1156 = vmatprep.subr.mxu0 0.0
    %1157 = vmatpush1.msra.mxu0 0.0
    %1158 = vmatprep.subr.mxu0 0.0
    %1159 = vmatpush1.msra.mxu0 0.0
    %1160 = vmatprep.mubr.f32.mxu0 0.0
    %v1161 = vand.u32 %v57, 4294901760
    %v1162 = vsub.f32 %v57, %v1161
    %v1163 = vand.u32 %v1162, 4294901760
    %v1164 = vsub.f32 %v1162, %v1163
    %v1165 = vand.u32 %v1164, 4294901760
    %1166 = vmatmul.mubr.f32.gmra.mrb[0].mxu0 %v1165
    %v1167 = vpop.f32.mrb[0].mxu0
    %v1168 = vadd.f32 0.0, %v1167
    %v1169 = vpop.f32.mrb[0].mxu0
    %1170 = vdwg.mxu0
    %1171 = vmatprep.subr.mxu0 0.0
    %v1172 = vand.u32 %v44, 4294901760
    %v1173 = vsub.f32 %v44, %v1172
    %v1174 = vand.u32 %v1173, 4294901760
    %v1175 = vsub.f32 %v1173, %v1174
    %v1176 = vand.u32 %v1175, 4294901760
    %1177 = vmatpush1.msra.mxu0 %v1176
    %1178 = vmatprep.subr.mxu0 0.0
    %v1179 = vand.u32 %v49, 4294901760
    %v1180 = vsub.f32 %v49, %v1179
    %v1181 = vand.u32 %v1180, 4294901760
    %v1182 = vsub.f32 %v1180, %v1181
    %v1183 = vand.u32 %v1182, 4294901760
    %1184 = vmatpush1.msra.mxu0 %v1183
    %1185 = vmatprep.subr.mxu0 0.0
    %v1186 = vand.u32 %v54, 4294901760
    %v1187 = vsub.f32 %v54, %v1186
    %v1188 = vand.u32 %v1187, 4294901760
    %v1189 = vsub.f32 %v1187, %v1188
    %v1190 = vand.u32 %v1189, 4294901760
    %1191 = vmatpush1.msra.mxu0 %v1190
    %1192 = vmatprep.subr.mxu0 0.0
    %1193 = vmatpush1.msra.mxu0 0.0
    %1194 = vmatprep.subr.mxu0 0.0
    %1195 = vmatpush1.msra.mxu0 0.0
    %1196 = vmatprep.subr.mxu0 0.0
    %1197 = vmatpush1.msra.mxu0 0.0
    %1198 = vmatprep.subr.mxu0 0.0
    %1199 = vmatpush1.msra.mxu0 0.0
    %1200 = vmatprep.subr.mxu0 0.0
    %1201 = vmatpush1.msra.mxu0 0.0
    %1202 = vmatprep.subr.mxu0 0.0
    %1203 = vmatpush1.msra.mxu0 0.0
    %1204 = vmatprep.subr.mxu0 0.0
    %1205 = vmatpush1.msra.mxu0 0.0
    %1206 = vmatprep.subr.mxu0 0.0
    %1207 = vmatpush1.msra.mxu0 0.0
    %1208 = vmatprep.subr.mxu0 0.0
    %1209 = vmatpush1.msra.mxu0 0.0
    %1210 = vmatprep.subr.mxu0 0.0
    %1211 = vmatpush1.msra.mxu0 0.0
    %1212 = vmatprep.subr.mxu0 0.0
    %1213 = vmatpush1.msra.mxu0 0.0
    %1214 = vmatprep.subr.mxu0 0.0
    %1215 = vmatpush1.msra.mxu0 0.0
    %1216 = vmatprep.subr.mxu0 0.0
    %1217 = vmatpush1.msra.mxu0 0.0
    %1218 = vmatprep.subr.mxu0 0.0
    %1219 = vmatpush1.msra.mxu0 0.0
    %1220 = vmatprep.subr.mxu0 0.0
    %1221 = vmatpush1.msra.mxu0 0.0
    %1222 = vmatprep.subr.mxu0 0.0
    %1223 = vmatpush1.msra.mxu0 0.0
    %1224 = vmatprep.subr.mxu0 0.0
    %1225 = vmatpush1.msra.mxu0 0.0
    %1226 = vmatprep.subr.mxu0 0.0
    %1227 = vmatpush1.msra.mxu0 0.0
    %1228 = vmatprep.subr.mxu0 0.0
    %1229 = vmatpush1.msra.mxu0 0.0
    %1230 = vmatprep.subr.mxu0 0.0
    %1231 = vmatpush1.msra.mxu0 0.0
    %1232 = vmatprep.subr.mxu0 0.0
    %1233 = vmatpush1.msra.mxu0 0.0
    %1234 = vmatprep.subr.mxu0 0.0
    %1235 = vmatpush1.msra.mxu0 0.0
    %1236 = vmatprep.subr.mxu0 0.0
    %1237 = vmatpush1.msra.mxu0 0.0
    %1238 = vmatprep.subr.mxu0 0.0
    %1239 = vmatpush1.msra.mxu0 0.0
    %1240 = vmatprep.subr.mxu0 0.0
    %1241 = vmatpush1.msra.mxu0 0.0
    %1242 = vmatprep.subr.mxu0 0.0
    %1243 = vmatpush1.msra.mxu0 0.0
    %1244 = vmatprep.subr.mxu0 0.0
    %1245 = vmatpush1.msra.mxu0 0.0
    %1246 = vmatprep.subr.mxu0 0.0
    %1247 = vmatpush1.msra.mxu0 0.0
    %1248 = vmatprep.subr.mxu0 0.0
    %1249 = vmatpush1.msra.mxu0 0.0
    %1250 = vmatprep.mubr.f32.mxu0 0.0
    %v1251 = vand.u32 %v57, 4294901760
    %1252 = vmatmul.mubr.f32.gmra.mrb[0].mxu0 %v1251
    %v1253 = vpop.f32.mrb[0].mxu0
    %v1254 = vadd.f32 %v1168, %v1253
    %v1255 = vpop.f32.mrb[0].mxu0
    %1256 = vdwg.mxu0
    %1257 = vmatprep.subr.mxu0 0.0
    %v1258 = vand.u32 %v44, 4294901760
    %v1259 = vsub.f32 %v44, %v1258
    %1260 = vmatpush1.msra.mxu0 %v1259
    %1261 = vmatprep.subr.mxu0 0.0
    %v1262 = vand.u32 %v49, 4294901760
    %v1263 = vsub.f32 %v49, %v1262
    %1264 = vmatpush1.msra.mxu0 %v1263
    %1265 = vmatprep.subr.mxu0 0.0
    %v1266 = vand.u32 %v54, 4294901760
    %v1267 = vsub.f32 %v54, %v1266
    %1268 = vmatpush1.msra.mxu0 %v1267
    %1269 = vmatprep.subr.mxu0 0.0
    %1270 = vmatpush1.msra.mxu0 0.0
    %1271 = vmatprep.subr.mxu0 0.0
    %1272 = vmatpush1.msra.mxu0 0.0
    %1273 = vmatprep.subr.mxu0 0.0
    %1274 = vmatpush1.msra.mxu0 0.0
    %1275 = vmatprep.subr.mxu0 0.0
    %1276 = vmatpush1.msra.mxu0 0.0
    %1277 = vmatprep.subr.mxu0 0.0
    %1278 = vmatpush1.msra.mxu0 0.0
    %1279 = vmatprep.subr.mxu0 0.0
    %1280 = vmatpush1.msra.mxu0 0.0
    %1281 = vmatprep.subr.mxu0 0.0
    %1282 = vmatpush1.msra.mxu0 0.0
    %1283 = vmatprep.subr.mxu0 0.0
    %1284 = vmatpush1.msra.mxu0 0.0
    %1285 = vmatprep.subr.mxu0 0.0
    %1286 = vmatpush1.msra.mxu0 0.0
    %1287 = vmatprep.subr.mxu0 0.0
    %1288 = vmatpush1.msra.mxu0 0.0
    %1289 = vmatprep.subr.mxu0 0.0
    %1290 = vmatpush1.msra.mxu0 0.0
    %1291 = vmatprep.subr.mxu0 0.0
    %1292 = vmatpush1.msra.mxu0 0.0
    %1293 = vmatprep.subr.mxu0 0.0
    %1294 = vmatpush1.msra.mxu0 0.0
    %1295 = vmatprep.subr.mxu0 0.0
    %1296 = vmatpush1.msra.mxu0 0.0
    %1297 = vmatprep.subr.mxu0 0.0
    %1298 = vmatpush1.msra.mxu0 0.0
    %1299 = vmatprep.subr.mxu0 0.0
    %1300 = vmatpush1.msra.mxu0 0.0
    %1301 = vmatprep.subr.mxu0 0.0
    %1302 = vmatpush1.msra.mxu0 0.0
    %1303 = vmatprep.subr.mxu0 0.0
    %1304 = vmatpush1.msra.mxu0 0.0
    %1305 = vmatprep.subr.mxu0 0.0
    %1306 = vmatpush1.msra.mxu0 0.0
    %1307 = vmatprep.subr.mxu0 0.0
    %1308 = vmatpush1.msra.mxu0 0.0
    %1309 = vmatprep.subr.mxu0 0.0
    %1310 = vmatpush1.msra.mxu0 0.0
    %1311 = vmatprep.subr.mxu0 0.0
    %1312 = vmatpush1.msra.mxu0 0.0
    %1313 = vmatprep.subr.mxu0 0.0
    %1314 = vmatpush1.msra.mxu0 0.0
    %1315 = vmatprep.subr.mxu0 0.0
    %1316 = vmatpush1.msra.mxu0 0.0
    %1317 = vmatprep.subr.mxu0 0.0
    %1318 = vmatpush1.msra.mxu0 0.0
    %1319 = vmatprep.subr.mxu0 0.0
    %1320 = vmatpush1.msra.mxu0 0.0
    %1321 = vmatprep.subr.mxu0 0.0
    %1322 = vmatpush1.msra.mxu0 0.0
    %1323 = vmatprep.subr.mxu0 0.0
    %1324 = vmatpush1.msra.mxu0 0.0
    %1325 = vmatprep.subr.mxu0 0.0
    %1326 = vmatpush1.msra.mxu0 0.0
    %1327 = vmatprep.mubr.f32.mxu0 0.0
    %v1328 = vand.u32 %v57, 4294901760
    %v1329 = vsub.f32 %v57, %v1328
    %1330 = vmatmul.mubr.f32.gmra.mrb[0].mxu0 %v1329
    %v1331 = vpop.f32.mrb[0].mxu0
    %v1332 = vadd.f32 %v1254, %v1331
    %v1333 = vpop.f32.mrb[0].mxu0
    %1334 = vdwg.mxu0
    %1335 = vmatprep.subr.mxu0 0.0
    %v1336 = vand.u32 %v44, 4294901760
    %1337 = vmatpush1.msra.mxu0 %v1336
    %1338 = vmatprep.subr.mxu0 0.0
    %v1339 = vand.u32 %v49, 4294901760
    %1340 = vmatpush1.msra.mxu0 %v1339
    %1341 = vmatprep.subr.mxu0 0.0
    %v1342 = vand.u32 %v54, 4294901760
    %1343 = vmatpush1.msra.mxu0 %v1342
    %1344 = vmatprep.subr.mxu0 0.0
    %1345 = vmatpush1.msra.mxu0 0.0
    %1346 = vmatprep.subr.mxu0 0.0
    %1347 = vmatpush1.msra.mxu0 0.0
    %1348 = vmatprep.subr.mxu0 0.0
    %1349 = vmatpush1.msra.mxu0 0.0
    %1350 = vmatprep.subr.mxu0 0.0
    %1351 = vmatpush1.msra.mxu0 0.0
    %1352 = vmatprep.subr.mxu0 0.0
    %1353 = vmatpush1.msra.mxu0 0.0
    %1354 = vmatprep.subr.mxu0 0.0
    %1355 = vmatpush1.msra.mxu0 0.0
    %1356 = vmatprep.subr.mxu0 0.0
    %1357 = vmatpush1.msra.mxu0 0.0
    %1358 = vmatprep.subr.mxu0 0.0
    %1359 = vmatpush1.msra.mxu0 0.0
    %1360 = vmatprep.subr.mxu0 0.0
    %1361 = vmatpush1.msra.mxu0 0.0
    %1362 = vmatprep.subr.mxu0 0.0
    %1363 = vmatpush1.msra.mxu0 0.0
    %1364 = vmatprep.subr.mxu0 0.0
    %1365 = vmatpush1.msra.mxu0 0.0
    %1366 = vmatprep.subr.mxu0 0.0
    %1367 = vmatpush1.msra.mxu0 0.0
    %1368 = vmatprep.subr.mxu0 0.0
    %1369 = vmatpush1.msra.mxu0 0.0
    %1370 = vmatprep.subr.mxu0 0.0
    %1371 = vmatpush1.msra.mxu0 0.0
    %1372 = vmatprep.subr.mxu0 0.0
    %1373 = vmatpush1.msra.mxu0 0.0
    %1374 = vmatprep.subr.mxu0 0.0
    %1375 = vmatpush1.msra.mxu0 0.0
    %1376 = vmatprep.subr.mxu0 0.0
    %1377 = vmatpush1.msra.mxu0 0.0
    %1378 = vmatprep.subr.mxu0 0.0
    %1379 = vmatpush1.msra.mxu0 0.0
    %1380 = vmatprep.subr.mxu0 0.0
    %1381 = vmatpush1.msra.mxu0 0.0
    %1382 = vmatprep.subr.mxu0 0.0
    %1383 = vmatpush1.msra.mxu0 0.0
    %1384 = vmatprep.subr.mxu0 0.0
    %1385 = vmatpush1.msra.mxu0 0.0
    %1386 = vmatprep.subr.mxu0 0.0
    %1387 = vmatpush1.msra.mxu0 0.0
    %1388 = vmatprep.subr.mxu0 0.0
    %1389 = vmatpush1.msra.mxu0 0.0
    %1390 = vmatprep.subr.mxu0 0.0
    %1391 = vmatpush1.msra.mxu0 0.0
    %1392 = vmatprep.subr.mxu0 0.0
    %1393 = vmatpush1.msra.mxu0 0.0
    %1394 = vmatprep.subr.mxu0 0.0
    %1395 = vmatpush1.msra.mxu0 0.0
    %1396 = vmatprep.subr.mxu0 0.0
    %1397 = vmatpush1.msra.mxu0 0.0
    %1398 = vmatprep.subr.mxu0 0.0
    %1399 = vmatpush1.msra.mxu0 0.0
    %1400 = vmatprep.subr.mxu0 0.0
    %1401 = vmatpush1.msra.mxu0 0.0
    %1402 = vmatprep.mubr.f32.mxu0 0.0
    %v1403 = vand.u32 %v57, 4294901760
    %v1404 = vsub.f32 %v57, %v1403
    %v1405 = vand.u32 %v1404, 4294901760
    %1406 = vmatmul.mubr.f32.gmra.mrb[0].mxu0 %v1405
    %v1407 = vpop.f32.mrb[0].mxu0
    %v1408 = vadd.f32 %v1332, %v1407
    %v1409 = vpop.f32.mrb[0].mxu0
    %1410 = vdwg.mxu0
    %1411 = vmatprep.subr.mxu0 0.0
    %v1412 = vand.u32 %v44, 4294901760
    %v1413 = vsub.f32 %v44, %v1412
    %v1414 = vand.u32 %v1413, 4294901760
    %1415 = vmatpush1.msra.mxu0 %v1414
    %1416 = vmatprep.subr.mxu0 0.0
    %v1417 = vand.u32 %v49, 4294901760
    %v1418 = vsub.f32 %v49, %v1417
    %v1419 = vand.u32 %v1418, 4294901760
    %1420 = vmatpush1.msra.mxu0 %v1419
    %1421 = vmatprep.subr.mxu0 0.0
    %v1422 = vand.u32 %v54, 4294901760
    %v1423 = vsub.f32 %v54, %v1422
    %v1424 = vand.u32 %v1423, 4294901760
    %1425 = vmatpush1.msra.mxu0 %v1424
    %1426 = vmatprep.subr.mxu0 0.0
    %1427 = vmatpush1.msra.mxu0 0.0
    %1428 = vmatprep.subr.mxu0 0.0
    %1429 = vmatpush1.msra.mxu0 0.0
    %1430 = vmatprep.subr.mxu0 0.0
    %1431 = vmatpush1.msra.mxu0 0.0
    %1432 = vmatprep.subr.mxu0 0.0
    %1433 = vmatpush1.msra.mxu0 0.0
    %1434 = vmatprep.subr.mxu0 0.0
    %1435 = vmatpush1.msra.mxu0 0.0
    %1436 = vmatprep.subr.mxu0 0.0
    %1437 = vmatpush1.msra.mxu0 0.0
    %1438 = vmatprep.subr.mxu0 0.0
    %1439 = vmatpush1.msra.mxu0 0.0
    %1440 = vmatprep.subr.mxu0 0.0
    %1441 = vmatpush1.msra.mxu0 0.0
    %1442 = vmatprep.subr.mxu0 0.0
    %1443 = vmatpush1.msra.mxu0 0.0
    %1444 = vmatprep.subr.mxu0 0.0
    %1445 = vmatpush1.msra.mxu0 0.0
    %1446 = vmatprep.subr.mxu0 0.0
    %1447 = vmatpush1.msra.mxu0 0.0
    %1448 = vmatprep.subr.mxu0 0.0
    %1449 = vmatpush1.msra.mxu0 0.0
    %1450 = vmatprep.subr.mxu0 0.0
    %1451 = vmatpush1.msra.mxu0 0.0
    %1452 = vmatprep.subr.mxu0 0.0
    %1453 = vmatpush1.msra.mxu0 0.0
    %1454 = vmatprep.subr.mxu0 0.0
    %1455 = vmatpush1.msra.mxu0 0.0
    %1456 = vmatprep.subr.mxu0 0.0
    %1457 = vmatpush1.msra.mxu0 0.0
    %1458 = vmatprep.subr.mxu0 0.0
    %1459 = vmatpush1.msra.mxu0 0.0
    %1460 = vmatprep.subr.mxu0 0.0
    %1461 = vmatpush1.msra.mxu0 0.0
    %1462 = vmatprep.subr.mxu0 0.0
    %1463 = vmatpush1.msra.mxu0 0.0
    %1464 = vmatprep.subr.mxu0 0.0
    %1465 = vmatpush1.msra.mxu0 0.0
    %1466 = vmatprep.subr.mxu0 0.0
    %1467 = vmatpush1.msra.mxu0 0.0
    %1468 = vmatprep.subr.mxu0 0.0
    %1469 = vmatpush1.msra.mxu0 0.0
    %1470 = vmatprep.subr.mxu0 0.0
    %1471 = vmatpush1.msra.mxu0 0.0
    %1472 = vmatprep.subr.mxu0 0.0
    %1473 = vmatpush1.msra.mxu0 0.0
    %1474 = vmatprep.subr.mxu0 0.0
    %1475 = vmatpush1.msra.mxu0 0.0
    %1476 = vmatprep.subr.mxu0 0.0
    %1477 = vmatpush1.msra.mxu0 0.0
    %1478 = vmatprep.subr.mxu0 0.0
    %1479 = vmatpush1.msra.mxu0 0.0
    %1480 = vmatprep.subr.mxu0 0.0
    %1481 = vmatpush1.msra.mxu0 0.0
    %1482 = vmatprep.subr.mxu0 0.0
    %1483 = vmatpush1.msra.mxu0 0.0
    %1484 = vmatprep.mubr.f32.mxu0 0.0
    %v1485 = vand.u32 %v57, 4294901760
    %1486 = vmatmul.mubr.f32.gmra.mrb[0].mxu0 %v1485
    %v1487 = vpop.f32.mrb[0].mxu0
    %v1488 = vadd.f32 %v1408, %v1487
    %v1489 = vpop.f32.mrb[0].mxu0
    %1490 = vdwg.mxu0
    %1491 = vmatprep.subr.mxu0 0.0
    %v1492 = vand.u32 %v44, 4294901760
    %1493 = vmatpush1.msra.mxu0 %v1492
    %1494 = vmatprep.subr.mxu0 0.0
    %v1495 = vand.u32 %v49, 4294901760
    %1496 = vmatpush1.msra.mxu0 %v1495
    %1497 = vmatprep.subr.mxu0 0.0
    %v1498 = vand.u32 %v54, 4294901760
    %1499 = vmatpush1.msra.mxu0 %v1498
    %1500 = vmatprep.subr.mxu0 0.0
    %1501 = vmatpush1.msra.mxu0 0.0
    %1502 = vmatprep.subr.mxu0 0.0
    %1503 = vmatpush1.msra.mxu0 0.0
    %1504 = vmatprep.subr.mxu0 0.0
    %1505 = vmatpush1.msra.mxu0 0.0
    %1506 = vmatprep.subr.mxu0 0.0
    %1507 = vmatpush1.msra.mxu0 0.0
    %1508 = vmatprep.subr.mxu0 0.0
    %1509 = vmatpush1.msra.mxu0 0.0
    %1510 = vmatprep.subr.mxu0 0.0
    %1511 = vmatpush1.msra.mxu0 0.0
    %1512 = vmatprep.subr.mxu0 0.0
    %1513 = vmatpush1.msra.mxu0 0.0
    %1514 = vmatprep.subr.mxu0 0.0
    %1515 = vmatpush1.msra.mxu0 0.0
    %1516 = vmatprep.subr.mxu0 0.0
    %1517 = vmatpush1.msra.mxu0 0.0
    %1518 = vmatprep.subr.mxu0 0.0
    %1519 = vmatpush1.msra.mxu0 0.0
    %1520 = vmatprep.subr.mxu0 0.0
    %1521 = vmatpush1.msra.mxu0 0.0
    %1522 = vmatprep.subr.mxu0 0.0
    %1523 = vmatpush1.msra.mxu0 0.0
    %1524 = vmatprep.subr.mxu0 0.0
    %1525 = vmatpush1.msra.mxu0 0.0
    %1526 = vmatprep.subr.mxu0 0.0
    %1527 = vmatpush1.msra.mxu0 0.0
    %1528 = vmatprep.subr.mxu0 0.0
    %1529 = vmatpush1.msra.mxu0 0.0
    %1530 = vmatprep.subr.mxu0 0.0
    %1531 = vmatpush1.msra.mxu0 0.0
    %1532 = vmatprep.subr.mxu0 0.0
    %1533 = vmatpush1.msra.mxu0 0.0
    %1534 = vmatprep.subr.mxu0 0.0
    %1535 = vmatpush1.msra.mxu0 0.0
    %1536 = vmatprep.subr.mxu0 0.0
    %1537 = vmatpush1.msra.mxu0 0.0
    %1538 = vmatprep.subr.mxu0 0.0
    %1539 = vmatpush1.msra.mxu0 0.0
    %1540 = vmatprep.subr.mxu0 0.0
    %1541 = vmatpush1.msra.mxu0 0.0
    %1542 = vmatprep.subr.mxu0 0.0
    %1543 = vmatpush1.msra.mxu0 0.0
    %1544 = vmatprep.subr.mxu0 0.0
    %1545 = vmatpush1.msra.mxu0 0.0
    %1546 = vmatprep.subr.mxu0 0.0
    %1547 = vmatpush1.msra.mxu0 0.0
    %1548 = vmatprep.subr.mxu0 0.0
    %1549 = vmatpush1.msra.mxu0 0.0
    %1550 = vmatprep.subr.mxu0 0.0
    %1551 = vmatpush1.msra.mxu0 0.0
    %1552 = vmatprep.subr.mxu0 0.0
    %1553 = vmatpush1.msra.mxu0 0.0
    %1554 = vmatprep.subr.mxu0 0.0
    %1555 = vmatpush1.msra.mxu0 0.0
    %1556 = vmatprep.subr.mxu0 0.0
    %1557 = vmatpush1.msra.mxu0 0.0
    %1558 = vmatprep.mubr.f32.mxu0 0.0
    %v1559 = vand.u32 %v57, 4294901760
    %1560 = vmatmul.mubr.f32.gmra.mrb[0].mxu0 %v1559
    %v1561 = vpop.f32.mrb[0].mxu0
    %v1562 = vadd.f32 %v1488, %v1561
    %v1563 = vpop.f32.mrb[0].mxu0
    %1564 = vdwg.mxu0
    %v1570 = vcombine.low %v572, %v574
    %v1571 = vcombine.high %v572, %v574
    %v1572 = vcombine.low %v1089, %v1091
    %v1573 = vcombine.high %v1089, %v1091
    %v1575 = vunpack.c.l.s4 1983009808
    %v1576 = vunpack.c.0.s8 %v1575
    %v1577 = vlaneseq
    %v1578 = vshrl.u32 %v1577, 7
    %v1579 = vsub.s32 %v1576, %v1578
    %v1580 = vrot.slane %v1570, %v1579
    %v1582 = vunpack.c.l.s4 1983009808
    %v1583 = vunpack.c.0.s8 %v1582
    %v1584 = vlaneseq
    %v1585 = vshrl.u32 %v1584, 7
    %v1586 = vsub.s32 %v1583, %v1585
    %v1587 = vrot.slane %v1571, %v1586
    %v1589 = vunpack.c.l.s4 1983009808
    %v1590 = vunpack.c.0.s8 %v1589
    %v1591 = vlaneseq
    %v1592 = vshrl.u32 %v1591, 7
    %v1593 = vsub.s32 %v1590, %v1592
    %v1594 = vrot.slane %v1572, %v1593
    %v1596 = vunpack.c.l.s4 1983009808
    %v1597 = vunpack.c.0.s8 %v1596
    %v1598 = vlaneseq
    %v1599 = vshrl.u32 %v1598, 7
    %v1600 = vsub.s32 %v1597, %v1599
    %v1601 = vrot.slane %v1573, %v1600
    %v1602 = vcombine.low %v1580, %v1594
    %v1603 = vcombine.high %v1580, %v1594
    %v1604 = vcombine.low %v1587, %v1601
    %v1605 = vcombine.high %v1587, %v1601
    %v1606 = vcombine.high %v1562, %v1562
    %v1608 = vunpack.c.l.s4 1983009808
    %v1609 = vunpack.c.0.s8 %v1608
    %v1610 = vlaneseq
    %v1611 = vshrl.u32 %v1610, 7
    %v1612 = vsub.s32 %v1609, %v1611
    %v1613 = vrot.slane %v1562, %v1612
    %v1615 = vunpack.c.l.s4 1983009808
    %v1616 = vunpack.c.0.s8 %v1615
    %v1617 = vlaneseq
    %v1618 = vshrl.u32 %v1617, 7
    %v1619 = vsub.s32 %v1616, %v1618
    %v1620 = vrot.slane %v1606, %v1619
    %v1621 = vcombine.high %v1613, %v1613
    %v1622 = vcombine.high %v1620, %v1620
    %1631 = vst [vmem:[#allocation5] sm:$0xff] %v1602
    %vm1632 = vcmask 254976
    %1633 = vst.msk [vmem:[#allocation5 + $0x8] sm:$0x3] %vm1632, %v1613
    %1634 = vst [vmem:[#allocation5 + $0xa] sm:$0xff] %v1603
    %1635 = vst.msk [vmem:[#allocation5 + $0x12] sm:$0x3] %vm1632, %v1621
    %1636 = vst [vmem:[#allocation5 + $0x14] sm:$0xff] %v1604
    %1637 = vst.msk [vmem:[#allocation5 + $0x1c] sm:$0x3] %vm1632, %v1620
    %1638 = vst [vmem:[#allocation5 + $0x1e] sm:$0xff] %v1605
    %1639 = vst.msk [vmem:[#allocation5 + $0x26] sm:$0x3] %vm1632, %v1622
    // Predicated region
    $region14: #{tpu_custom_call.1} parent=1 // pred_check
      _
    $region15: #{tpu_custom_call.1} parent=1 // pred_check_branch
      %1641 = sbr.rel (0) target = $region17
    $region16: #{tpu_custom_call.1} parent=1 // pred_region
      %s1643 = ssub.s32 640, 160
      %1644 = vsyncadd [#allocation4], %s1643
      %s1645 = sshll.u32 [#allocation5], 4
      %s1646 = int_to_ptr.vmem [resolvable:$true] %s1645
      %1651 = dma.vmem_to_hbm [thread:$0]  %s1646, 160, %s2, [#allocation4], 160, 160, 10
    $region17: #{tpu_custom_call.1} parent=1 // pred_fallthru
      _
    // Predicated region
    $region18: #{tpu_custom_call.1} parent=1 // pred_check
      _
    $region19: #{tpu_custom_call.1} parent=1 // pred_check_branch
      %1653 = sbr.rel (0) target = $region21
    $region20: #{tpu_custom_call.1} parent=1 // pred_region
      %1654 = dma.done [#allocation4], 640
    $region21: #{tpu_custom_call.1} parent=1 // pred_fallthru
      _
    %1655 = vsyncpa [#allocation3], 1
    %1656 = vsyncpa [#allocation4], 1

</llo_original>
